<compile_context>
chip_gen: v5e
topology: v5e:2x2
jax: 0.10.0
libtpu: 0.0.40
codegen_flags: <defaults>
</compile_context>

<pallas_src>
import functools

import jax
import jax.numpy as jnp
from jax.experimental import pallas as pl
from jax.experimental.pallas import tpu as pltpu

HIDDEN = 100           # torch hidden size
INPUT = 1
HPAD = 128             # HIDDEN padded to a full vreg lane width
G4 = 4 * HPAD          # fused gate width (i, f, g, o), each 128-lane aligned
SUBLANE = 8


def _lstm_kernel(x_ref, wih_ref, whh_ref, b_ref, wfc_ref, bfc_ref, out_ref,
                 *, seq_len):
    """Runs the full T-step recurrence for one (BB, HPAD) batch block."""
    bb = x_ref.shape[1]

    wih = wih_ref[...]          # (1, 4*HPAD)    input->gate weights (row vector)
    whh = whh_ref[...]          # (HPAD, 4*HPAD) fused recurrent weights
    bias = b_ref[...]           # (1, 4*HPAD)    b_ih + b_hh, gate-packed

    def step(t, carry):
        h, c = carry
        x_t = x_ref[t]          # (BB, 1) current timestep input
        # One fused MXU matmul for all 4 gates; the K=1 input contribution is a
        # VPU broadcast-multiply, off the MXU critical path.
        gates = (jnp.dot(h, whh, preferred_element_type=jnp.float32)
                 + x_t * wih + bias)                       # (BB, 4*HPAD)
        i_g = jax.nn.sigmoid(gates[:, 0 * HPAD:1 * HPAD])
        f_g = jax.nn.sigmoid(gates[:, 1 * HPAD:2 * HPAD])
        g_g = jnp.tanh(gates[:, 2 * HPAD:3 * HPAD])
        o_g = jax.nn.sigmoid(gates[:, 3 * HPAD:4 * HPAD])
        c_new = f_g * c + i_g * g_g
        h_new = o_g * jnp.tanh(c_new)
        return h_new, c_new

    h0 = jnp.zeros((bb, HPAD), jnp.float32)
    c0 = jnp.zeros((bb, HPAD), jnp.float32)
    unroll = True if seq_len <= 32 else 8
    h_last, _ = jax.lax.fori_loop(0, seq_len, step, (h0, c0), unroll=unroll)

    # fc epilogue: padded (HPAD, HPAD) weight keeps the output block lane-dense
    # (result lives in lane 0; all other lanes are exactly 0).
    out_ref[...] = (jnp.dot(h_last, wfc_ref[...],
                            preferred_element_type=jnp.float32)
                    + bfc_ref[...])


def _round_up(x, m):
    return (x + m - 1) // m * m


def pack_params(params):
    """PyTorch-layout params -> fused / lane-padded kernel layouts."""
    w_ih, w_hh, b_ih, b_hh, w_fc, b_fc = params
    H = w_hh.shape[1]
    wih_cat = jnp.zeros((1, G4), jnp.float32)
    whh_cat = jnp.zeros((HPAD, G4), jnp.float32)
    bias_cat = jnp.zeros((1, G4), jnp.float32)
    for k in range(4):                              # PyTorch gate order: i, f, g, o
        lo = k * HPAD
        wih_cat = wih_cat.at[0, lo:lo + H].set(w_ih[k * H:(k + 1) * H, 0])
        whh_cat = whh_cat.at[:H, lo:lo + H].set(w_hh[k * H:(k + 1) * H, :].T)
        bias_cat = bias_cat.at[0, lo:lo + H].set(
            b_ih[k * H:(k + 1) * H] + b_hh[k * H:(k + 1) * H])
    wfc_pad = jnp.zeros((HPAD, HPAD), jnp.float32).at[:H, 0].set(w_fc[0, :])
    bfc_pad = jnp.zeros((1, HPAD), jnp.float32).at[0, 0].set(b_fc[0])
    return wih_cat, whh_cat, bias_cat, wfc_pad, bfc_pad


def lstm_forward(x, params):
    """x: (B, T, 1) float32 -> (B, 1) float32  (== torch LSTM(1,100) + Linear(100,1))."""
    wih_cat, whh_cat, bias_cat, wfc_pad, bfc_pad = pack_params(params)
    B, T, _ = x.shape
    bpad = _round_up(max(B, SUBLANE), SUBLANE)
    # Single batch block for small B; for large B the batch is tiled over a
    # "parallel" grid axis (lets v7x spread batch blocks across its 2 TensorCores).
    bb = min(bpad, 512)
    bpad = _round_up(bpad, bb)

    xt = jnp.transpose(x, (1, 0, 2))                        # (T, B, 1) time-major
    xt = jnp.pad(xt, ((0, 0), (0, bpad - B), (0, 0)))       # pad batch sublanes

    kernel = functools.partial(_lstm_kernel, seq_len=T)
    out_pad = pl.pallas_call(
        kernel,
        out_shape=jax.ShapeDtypeStruct((bpad, HPAD), jnp.float32),
        grid_spec=pltpu.PrefetchScalarGridSpec(
            num_scalar_prefetch=0,
            grid=(bpad // bb,),
            in_specs=[
                pl.BlockSpec((T, bb, 1), lambda b: (0, b, 0)),     # x (time-major)
                pl.BlockSpec((1, G4), lambda b: (0, 0)),           # W_ih (gate-packed)
                pl.BlockSpec((HPAD, G4), lambda b: (0, 0)),        # W_hh (gate-packed)
                pl.BlockSpec((1, G4), lambda b: (0, 0)),           # b_ih + b_hh
                pl.BlockSpec((HPAD, HPAD), lambda b: (0, 0)),      # fc weight (padded)
                pl.BlockSpec((1, HPAD), lambda b: (0, 0)),         # fc bias (padded)
            ],
            out_specs=pl.BlockSpec((bb, HPAD), lambda b: (b, 0)),  # lane-dense output
        ),
        compiler_params=pltpu.CompilerParams(
            dimension_semantics=("parallel",)),
    )(xt, wih_cat, whh_cat, bias_cat, wfc_pad, bfc_pad)

    return out_pad[:B, :1]


def init_params(key):
    """Deterministic init with PyTorch nn.LSTM / nn.Linear shapes and gate order."""
    k = 1.0 / jnp.sqrt(jnp.float32(HIDDEN))
    ks = jax.random.split(key, 6)
    w_ih = jax.random.uniform(ks[0], (4 * HIDDEN, INPUT), jnp.float32, -k, k)
    w_hh = jax.random.uniform(ks[1], (4 * HIDDEN, HIDDEN), jnp.float32, -k, k)
    b_ih = jax.random.uniform(ks[2], (4 * HIDDEN,), jnp.float32, -k, k)
    b_hh = jax.random.uniform(ks[3], (4 * HIDDEN,), jnp.float32, -k, k)
    w_fc = jax.random.uniform(ks[4], (1, HIDDEN), jnp.float32, -k, k)
    b_fc = jax.random.uniform(ks[5], (1,), jnp.float32, -k, k)
    return w_ih, w_hh, b_ih, b_hh, w_fc, b_fc


def lstm_ref(x, params):
    """Pure-JAX reference with the same math as torch nn.LSTM + Linear."""
    w_ih, w_hh, b_ih, b_hh, w_fc, b_fc = params
    H = w_hh.shape[1]
    B = x.shape[0]
    h0 = jnp.zeros((B, H), jnp.float32)
    c0 = jnp.zeros((B, H), jnp.float32)

    def step(carry, x_t):
        h, c = carry
        z = x_t @ w_ih.T + h @ w_hh.T + b_ih + b_hh        # (B, 4H)
        i_g = jax.nn.sigmoid(z[:, 0 * H:1 * H])
        f_g = jax.nn.sigmoid(z[:, 1 * H:2 * H])
        g_g = jnp.tanh(z[:, 2 * H:3 * H])
        o_g = jax.nn.sigmoid(z[:, 3 * H:4 * H])
        c = f_g * c + i_g * g_g
        h = o_g * jnp.tanh(c)
        return (h, c), None

    (h_last, _), _ = jax.lax.scan(step, (h0, c0), jnp.transpose(x, (1, 0, 2)))
    return h_last @ w_fc.T + b_fc


if __name__ == "__main__":
    key = jax.random.PRNGKey(0)
    k_x, k_p = jax.random.split(key)

    B, T = 2, 8
    x = jax.random.normal(k_x, (B, T, INPUT), jnp.float32)
    params = init_params(k_p)

    out = jax.block_until_ready(lstm_forward(x, params))
    ref = lstm_ref(x, params)

    assert out.shape == (B, 1), out.shape
    assert jnp.allclose(out, ref, atol=1e-4, rtol=1e-4), (out, ref)

    print("KERNEL_OK")
</pallas_src>

<mosaic_0001>
module attributes {stable_mosaic.version = 11 : i64} {
  func.func @_lstm_kernel(%arg0: i32, %arg1: memref<8x8x1xf32, #tpu.memory_space<vmem>>, %arg2: memref<1x512xf32, #tpu.memory_space<vmem>>, %arg3: memref<128x512xf32, #tpu.memory_space<vmem>>, %arg4: memref<1x512xf32, #tpu.memory_space<vmem>>, %arg5: memref<128x128xf32, #tpu.memory_space<vmem>>, %arg6: memref<1x128xf32, #tpu.memory_space<vmem>>, %arg7: memref<8x128xf32, #tpu.memory_space<vmem>>) attributes {dimension_semantics = [#tpu.dimension_semantics<parallel>], iteration_bounds = array<i64: 1>, scalar_prefetch = 0 : i64, scratch_operands = 0 : i64, tpu.core_type = #tpu.core_type<tc>, window_params = [{transform_indices = @transform_0, window_bounds = array<i64: 8, 8, 1>}, {pipeline_mode = #tpu.pipeline_mode<synchronous>, transform_indices = @transform_1, window_bounds = array<i64: 1, 512>}, {pipeline_mode = #tpu.pipeline_mode<synchronous>, transform_indices = @transform_2, window_bounds = array<i64: 128, 512>}, {pipeline_mode = #tpu.pipeline_mode<synchronous>, transform_indices = @transform_3, window_bounds = array<i64: 1, 512>}, {pipeline_mode = #tpu.pipeline_mode<synchronous>, transform_indices = @transform_4, window_bounds = array<i64: 128, 128>}, {pipeline_mode = #tpu.pipeline_mode<synchronous>, transform_indices = @transform_5, window_bounds = array<i64: 1, 128>}, {transform_indices = @transform_6, window_bounds = array<i64: 8, 128>}]} {
    %c0 = arith.constant 0 : index
    %c0_0 = arith.constant 0 : index
    %0 = vector.load %arg2[%c0, %c0_0] : memref<1x512xf32, #tpu.memory_space<vmem>>, vector<1x512xf32>
    %c0_1 = arith.constant 0 : index
    %c0_2 = arith.constant 0 : index
    %1 = vector.load %arg3[%c0_1, %c0_2] : memref<128x512xf32, #tpu.memory_space<vmem>>, vector<128x512xf32>
    %c0_3 = arith.constant 0 : index
    %c0_4 = arith.constant 0 : index
    %2 = vector.load %arg4[%c0_3, %c0_4] : memref<1x512xf32, #tpu.memory_space<vmem>>, vector<1x512xf32>
    %cst = arith.constant 0.000000e+00 : f32
    %3 = vector.broadcast %cst : f32 to vector<8x128xf32>
    %cst_5 = arith.constant 0.000000e+00 : f32
    %4 = vector.broadcast %cst_5 : f32 to vector<8x128xf32>
    %c0_i32 = arith.constant 0 : i32
    %5 = arith.index_cast %c0_i32 : i32 to index
    %c0_6 = arith.constant 0 : index
    %c0_7 = arith.constant 0 : index
    %6 = vector.load %arg1[%5, %c0_6, %c0_7] : memref<8x8x1xf32, #tpu.memory_space<vmem>>, vector<1x8x1xf32>
    %7 = vector.shape_cast %6 : vector<1x8x1xf32> to vector<8x1xf32>
    %cst_8 = arith.constant dense<0.000000e+00> : vector<8x512xf32>
    %8 = tpu.matmul %3, %1, %cst_8 {dimension_numbers = #tpu.dot_dimension_numbers<[1], [0], [0], [1], [0, 0, 1, 1], [], []>} : vector<8x128xf32>, vector<128x512xf32>, vector<8x512xf32> -> vector<8x512xf32>
    %9 = vector.broadcast %7 : vector<8x1xf32> to vector<8x512xf32>
    %10 = vector.broadcast %0 : vector<1x512xf32> to vector<8x512xf32>
    %11 = arith.mulf %9, %10 : vector<8x512xf32>
    %12 = arith.addf %8, %11 : vector<8x512xf32>
    %13 = vector.broadcast %2 : vector<1x512xf32> to vector<8x512xf32>
    %14 = arith.addf %12, %13 : vector<8x512xf32>
    %15 = vector.extract_strided_slice %14 {offsets = [0, 0], sizes = [8, 128], strides = [1, 1]} : vector<8x512xf32> to vector<8x128xf32>
    %16 = arith.negf %15 : vector<8x128xf32>
    %17 = math.exp %16 : vector<8x128xf32>
    %cst_9 = arith.constant 1.000000e+00 : f32
    %18 = vector.broadcast %cst_9 : f32 to vector<8x128xf32>
    %19 = arith.addf %18, %17 : vector<8x128xf32>
    %20 = arith.divf %18, %19 : vector<8x128xf32>
    %21 = vector.extract_strided_slice %14 {offsets = [0, 128], sizes = [8, 128], strides = [1, 1]} : vector<8x512xf32> to vector<8x128xf32>
    %22 = arith.negf %21 : vector<8x128xf32>
    %23 = math.exp %22 : vector<8x128xf32>
    %cst_10 = arith.constant 1.000000e+00 : f32
    %24 = vector.broadcast %cst_10 : f32 to vector<8x128xf32>
    %25 = arith.addf %24, %23 : vector<8x128xf32>
    %26 = arith.divf %24, %25 : vector<8x128xf32>
    %27 = vector.extract_strided_slice %14 {offsets = [0, 256], sizes = [8, 128], strides = [1, 1]} : vector<8x512xf32> to vector<8x128xf32>
    %28 = math.tanh %27 : vector<8x128xf32>
    %29 = vector.extract_strided_slice %14 {offsets = [0, 384], sizes = [8, 128], strides = [1, 1]} : vector<8x512xf32> to vector<8x128xf32>
    %30 = arith.negf %29 : vector<8x128xf32>
    %31 = math.exp %30 : vector<8x128xf32>
    %cst_11 = arith.constant 1.000000e+00 : f32
    %32 = vector.broadcast %cst_11 : f32 to vector<8x128xf32>
    %33 = arith.addf %32, %31 : vector<8x128xf32>
    %34 = arith.divf %32, %33 : vector<8x128xf32>
    %35 = arith.mulf %26, %4 : vector<8x128xf32>
    %36 = arith.mulf %20, %28 : vector<8x128xf32>
    %37 = arith.addf %35, %36 : vector<8x128xf32>
    %38 = math.tanh %37 : vector<8x128xf32>
    %39 = arith.mulf %34, %38 : vector<8x128xf32>
    %c1_i32 = arith.constant 1 : i32
    %40 = arith.index_cast %c1_i32 : i32 to index
    %c0_12 = arith.constant 0 : index
    %c0_13 = arith.constant 0 : index
    %41 = vector.load %arg1[%40, %c0_12, %c0_13] : memref<8x8x1xf32, #tpu.memory_space<vmem>>, vector<1x8x1xf32>
    %42 = vector.shape_cast %41 : vector<1x8x1xf32> to vector<8x1xf32>
    %cst_14 = arith.constant dense<0.000000e+00> : vector<8x512xf32>
    %43 = tpu.matmul %39, %1, %cst_14 {dimension_numbers = #tpu.dot_dimension_numbers<[1], [0], [0], [1], [0, 0, 1, 1], [], []>} : vector<8x128xf32>, vector<128x512xf32>, vector<8x512xf32> -> vector<8x512xf32>
    %44 = vector.broadcast %42 : vector<8x1xf32> to vector<8x512xf32>
    %45 = vector.broadcast %0 : vector<1x512xf32> to vector<8x512xf32>
    %46 = arith.mulf %44, %45 : vector<8x512xf32>
    %47 = arith.addf %43, %46 : vector<8x512xf32>
    %48 = vector.broadcast %2 : vector<1x512xf32> to vector<8x512xf32>
    %49 = arith.addf %47, %48 : vector<8x512xf32>
    %50 = vector.extract_strided_slice %49 {offsets = [0, 0], sizes = [8, 128], strides = [1, 1]} : vector<8x512xf32> to vector<8x128xf32>
    %51 = arith.negf %50 : vector<8x128xf32>
    %52 = math.exp %51 : vector<8x128xf32>
    %cst_15 = arith.constant 1.000000e+00 : f32
    %53 = vector.broadcast %cst_15 : f32 to vector<8x128xf32>
    %54 = arith.addf %53, %52 : vector<8x128xf32>
    %55 = arith.divf %53, %54 : vector<8x128xf32>
    %56 = vector.extract_strided_slice %49 {offsets = [0, 128], sizes = [8, 128], strides = [1, 1]} : vector<8x512xf32> to vector<8x128xf32>
    %57 = arith.negf %56 : vector<8x128xf32>
    %58 = math.exp %57 : vector<8x128xf32>
    %cst_16 = arith.constant 1.000000e+00 : f32
    %59 = vector.broadcast %cst_16 : f32 to vector<8x128xf32>
    %60 = arith.addf %59, %58 : vector<8x128xf32>
    %61 = arith.divf %59, %60 : vector<8x128xf32>
    %62 = vector.extract_strided_slice %49 {offsets = [0, 256], sizes = [8, 128], strides = [1, 1]} : vector<8x512xf32> to vector<8x128xf32>
    %63 = math.tanh %62 : vector<8x128xf32>
    %64 = vector.extract_strided_slice %49 {offsets = [0, 384], sizes = [8, 128], strides = [1, 1]} : vector<8x512xf32> to vector<8x128xf32>
    %65 = arith.negf %64 : vector<8x128xf32>
    %66 = math.exp %65 : vector<8x128xf32>
    %cst_17 = arith.constant 1.000000e+00 : f32
    %67 = vector.broadcast %cst_17 : f32 to vector<8x128xf32>
    %68 = arith.addf %67, %66 : vector<8x128xf32>
    %69 = arith.divf %67, %68 : vector<8x128xf32>
    %70 = arith.mulf %61, %37 : vector<8x128xf32>
    %71 = arith.mulf %55, %63 : vector<8x128xf32>
    %72 = arith.addf %70, %71 : vector<8x128xf32>
    %73 = math.tanh %72 : vector<8x128xf32>
    %74 = arith.mulf %69, %73 : vector<8x128xf32>
    %c2_i32 = arith.constant 2 : i32
    %75 = arith.index_cast %c2_i32 : i32 to index
    %c0_18 = arith.constant 0 : index
    %c0_19 = arith.constant 0 : index
    %76 = vector.load %arg1[%75, %c0_18, %c0_19] : memref<8x8x1xf32, #tpu.memory_space<vmem>>, vector<1x8x1xf32>
    %77 = vector.shape_cast %76 : vector<1x8x1xf32> to vector<8x1xf32>
    %cst_20 = arith.constant dense<0.000000e+00> : vector<8x512xf32>
    %78 = tpu.matmul %74, %1, %cst_20 {dimension_numbers = #tpu.dot_dimension_numbers<[1], [0], [0], [1], [0, 0, 1, 1], [], []>} : vector<8x128xf32>, vector<128x512xf32>, vector<8x512xf32> -> vector<8x512xf32>
    %79 = vector.broadcast %77 : vector<8x1xf32> to vector<8x512xf32>
    %80 = vector.broadcast %0 : vector<1x512xf32> to vector<8x512xf32>
    %81 = arith.mulf %79, %80 : vector<8x512xf32>
    %82 = arith.addf %78, %81 : vector<8x512xf32>
    %83 = vector.broadcast %2 : vector<1x512xf32> to vector<8x512xf32>
    %84 = arith.addf %82, %83 : vector<8x512xf32>
    %85 = vector.extract_strided_slice %84 {offsets = [0, 0], sizes = [8, 128], strides = [1, 1]} : vector<8x512xf32> to vector<8x128xf32>
    %86 = arith.negf %85 : vector<8x128xf32>
    %87 = math.exp %86 : vector<8x128xf32>
    %cst_21 = arith.constant 1.000000e+00 : f32
    %88 = vector.broadcast %cst_21 : f32 to vector<8x128xf32>
    %89 = arith.addf %88, %87 : vector<8x128xf32>
    %90 = arith.divf %88, %89 : vector<8x128xf32>
    %91 = vector.extract_strided_slice %84 {offsets = [0, 128], sizes = [8, 128], strides = [1, 1]} : vector<8x512xf32> to vector<8x128xf32>
    %92 = arith.negf %91 : vector<8x128xf32>
    %93 = math.exp %92 : vector<8x128xf32>
    %cst_22 = arith.constant 1.000000e+00 : f32
    %94 = vector.broadcast %cst_22 : f32 to vector<8x128xf32>
    %95 = arith.addf %94, %93 : vector<8x128xf32>
    %96 = arith.divf %94, %95 : vector<8x128xf32>
    %97 = vector.extract_strided_slice %84 {offsets = [0, 256], sizes = [8, 128], strides = [1, 1]} : vector<8x512xf32> to vector<8x128xf32>
    %98 = math.tanh %97 : vector<8x128xf32>
    %99 = vector.extract_strided_slice %84 {offsets = [0, 384], sizes = [8, 128], strides = [1, 1]} : vector<8x512xf32> to vector<8x128xf32>
    %100 = arith.negf %99 : vector<8x128xf32>
    %101 = math.exp %100 : vector<8x128xf32>
    %cst_23 = arith.constant 1.000000e+00 : f32
    %102 = vector.broadcast %cst_23 : f32 to vector<8x128xf32>
    %103 = arith.addf %102, %101 : vector<8x128xf32>
    %104 = arith.divf %102, %103 : vector<8x128xf32>
    %105 = arith.mulf %96, %72 : vector<8x128xf32>
    %106 = arith.mulf %90, %98 : vector<8x128xf32>
    %107 = arith.addf %105, %106 : vector<8x128xf32>
    %108 = math.tanh %107 : vector<8x128xf32>
    %109 = arith.mulf %104, %108 : vector<8x128xf32>
    %c3_i32 = arith.constant 3 : i32
    %110 = arith.index_cast %c3_i32 : i32 to index
    %c0_24 = arith.constant 0 : index
    %c0_25 = arith.constant 0 : index
    %111 = vector.load %arg1[%110, %c0_24, %c0_25] : memref<8x8x1xf32, #tpu.memory_space<vmem>>, vector<1x8x1xf32>
    %112 = vector.shape_cast %111 : vector<1x8x1xf32> to vector<8x1xf32>
    %cst_26 = arith.constant dense<0.000000e+00> : vector<8x512xf32>
    %113 = tpu.matmul %109, %1, %cst_26 {dimension_numbers = #tpu.dot_dimension_numbers<[1], [0], [0], [1], [0, 0, 1, 1], [], []>} : vector<8x128xf32>, vector<128x512xf32>, vector<8x512xf32> -> vector<8x512xf32>
    %114 = vector.broadcast %112 : vector<8x1xf32> to vector<8x512xf32>
    %115 = vector.broadcast %0 : vector<1x512xf32> to vector<8x512xf32>
    %116 = arith.mulf %114, %115 : vector<8x512xf32>
    %117 = arith.addf %113, %116 : vector<8x512xf32>
    %118 = vector.broadcast %2 : vector<1x512xf32> to vector<8x512xf32>
    %119 = arith.addf %117, %118 : vector<8x512xf32>
    %120 = vector.extract_strided_slice %119 {offsets = [0, 0], sizes = [8, 128], strides = [1, 1]} : vector<8x512xf32> to vector<8x128xf32>
    %121 = arith.negf %120 : vector<8x128xf32>
    %122 = math.exp %121 : vector<8x128xf32>
    %cst_27 = arith.constant 1.000000e+00 : f32
    %123 = vector.broadcast %cst_27 : f32 to vector<8x128xf32>
    %124 = arith.addf %123, %122 : vector<8x128xf32>
    %125 = arith.divf %123, %124 : vector<8x128xf32>
    %126 = vector.extract_strided_slice %119 {offsets = [0, 128], sizes = [8, 128], strides = [1, 1]} : vector<8x512xf32> to vector<8x128xf32>
    %127 = arith.negf %126 : vector<8x128xf32>
    %128 = math.exp %127 : vector<8x128xf32>
    %cst_28 = arith.constant 1.000000e+00 : f32
    %129 = vector.broadcast %cst_28 : f32 to vector<8x128xf32>
    %130 = arith.addf %129, %128 : vector<8x128xf32>
    %131 = arith.divf %129, %130 : vector<8x128xf32>
    %132 = vector.extract_strided_slice %119 {offsets = [0, 256], sizes = [8, 128], strides = [1, 1]} : vector<8x512xf32> to vector<8x128xf32>
    %133 = math.tanh %132 : vector<8x128xf32>
    %134 = vector.extract_strided_slice %119 {offsets = [0, 384], sizes = [8, 128], strides = [1, 1]} : vector<8x512xf32> to vector<8x128xf32>
    %135 = arith.negf %134 : vector<8x128xf32>
    %136 = math.exp %135 : vector<8x128xf32>
    %cst_29 = arith.constant 1.000000e+00 : f32
    %137 = vector.broadcast %cst_29 : f32 to vector<8x128xf32>
    %138 = arith.addf %137, %136 : vector<8x128xf32>
    %139 = arith.divf %137, %138 : vector<8x128xf32>
    %140 = arith.mulf %131, %107 : vector<8x128xf32>
    %141 = arith.mulf %125, %133 : vector<8x128xf32>
    %142 = arith.addf %140, %141 : vector<8x128xf32>
    %143 = math.tanh %142 : vector<8x128xf32>
    %144 = arith.mulf %139, %143 : vector<8x128xf32>
    %c4_i32 = arith.constant 4 : i32
    %145 = arith.index_cast %c4_i32 : i32 to index
    %c0_30 = arith.constant 0 : index
    %c0_31 = arith.constant 0 : index
    %146 = vector.load %arg1[%145, %c0_30, %c0_31] : memref<8x8x1xf32, #tpu.memory_space<vmem>>, vector<1x8x1xf32>
    %147 = vector.shape_cast %146 : vector<1x8x1xf32> to vector<8x1xf32>
    %cst_32 = arith.constant dense<0.000000e+00> : vector<8x512xf32>
    %148 = tpu.matmul %144, %1, %cst_32 {dimension_numbers = #tpu.dot_dimension_numbers<[1], [0], [0], [1], [0, 0, 1, 1], [], []>} : vector<8x128xf32>, vector<128x512xf32>, vector<8x512xf32> -> vector<8x512xf32>
    %149 = vector.broadcast %147 : vector<8x1xf32> to vector<8x512xf32>
    %150 = vector.broadcast %0 : vector<1x512xf32> to vector<8x512xf32>
    %151 = arith.mulf %149, %150 : vector<8x512xf32>
    %152 = arith.addf %148, %151 : vector<8x512xf32>
    %153 = vector.broadcast %2 : vector<1x512xf32> to vector<8x512xf32>
    %154 = arith.addf %152, %153 : vector<8x512xf32>
    %155 = vector.extract_strided_slice %154 {offsets = [0, 0], sizes = [8, 128], strides = [1, 1]} : vector<8x512xf32> to vector<8x128xf32>
    %156 = arith.negf %155 : vector<8x128xf32>
    %157 = math.exp %156 : vector<8x128xf32>
    %cst_33 = arith.constant 1.000000e+00 : f32
    %158 = vector.broadcast %cst_33 : f32 to vector<8x128xf32>
    %159 = arith.addf %158, %157 : vector<8x128xf32>
    %160 = arith.divf %158, %159 : vector<8x128xf32>
    %161 = vector.extract_strided_slice %154 {offsets = [0, 128], sizes = [8, 128], strides = [1, 1]} : vector<8x512xf32> to vector<8x128xf32>
    %162 = arith.negf %161 : vector<8x128xf32>
    %163 = math.exp %162 : vector<8x128xf32>
    %cst_34 = arith.constant 1.000000e+00 : f32
    %164 = vector.broadcast %cst_34 : f32 to vector<8x128xf32>
    %165 = arith.addf %164, %163 : vector<8x128xf32>
    %166 = arith.divf %164, %165 : vector<8x128xf32>
    %167 = vector.extract_strided_slice %154 {offsets = [0, 256], sizes = [8, 128], strides = [1, 1]} : vector<8x512xf32> to vector<8x128xf32>
    %168 = math.tanh %167 : vector<8x128xf32>
    %169 = vector.extract_strided_slice %154 {offsets = [0, 384], sizes = [8, 128], strides = [1, 1]} : vector<8x512xf32> to vector<8x128xf32>
    %170 = arith.negf %169 : vector<8x128xf32>
    %171 = math.exp %170 : vector<8x128xf32>
    %cst_35 = arith.constant 1.000000e+00 : f32
    %172 = vector.broadcast %cst_35 : f32 to vector<8x128xf32>
    %173 = arith.addf %172, %171 : vector<8x128xf32>
    %174 = arith.divf %172, %173 : vector<8x128xf32>
    %175 = arith.mulf %166, %142 : vector<8x128xf32>
    %176 = arith.mulf %160, %168 : vector<8x128xf32>
    %177 = arith.addf %175, %176 : vector<8x128xf32>
    %178 = math.tanh %177 : vector<8x128xf32>
    %179 = arith.mulf %174, %178 : vector<8x128xf32>
    %c5_i32 = arith.constant 5 : i32
    %180 = arith.index_cast %c5_i32 : i32 to index
    %c0_36 = arith.constant 0 : index
    %c0_37 = arith.constant 0 : index
    %181 = vector.load %arg1[%180, %c0_36, %c0_37] : memref<8x8x1xf32, #tpu.memory_space<vmem>>, vector<1x8x1xf32>
    %182 = vector.shape_cast %181 : vector<1x8x1xf32> to vector<8x1xf32>
    %cst_38 = arith.constant dense<0.000000e+00> : vector<8x512xf32>
    %183 = tpu.matmul %179, %1, %cst_38 {dimension_numbers = #tpu.dot_dimension_numbers<[1], [0], [0], [1], [0, 0, 1, 1], [], []>} : vector<8x128xf32>, vector<128x512xf32>, vector<8x512xf32> -> vector<8x512xf32>
    %184 = vector.broadcast %182 : vector<8x1xf32> to vector<8x512xf32>
    %185 = vector.broadcast %0 : vector<1x512xf32> to vector<8x512xf32>
    %186 = arith.mulf %184, %185 : vector<8x512xf32>
    %187 = arith.addf %183, %186 : vector<8x512xf32>
    %188 = vector.broadcast %2 : vector<1x512xf32> to vector<8x512xf32>
    %189 = arith.addf %187, %188 : vector<8x512xf32>
    %190 = vector.extract_strided_slice %189 {offsets = [0, 0], sizes = [8, 128], strides = [1, 1]} : vector<8x512xf32> to vector<8x128xf32>
    %191 = arith.negf %190 : vector<8x128xf32>
    %192 = math.exp %191 : vector<8x128xf32>
    %cst_39 = arith.constant 1.000000e+00 : f32
    %193 = vector.broadcast %cst_39 : f32 to vector<8x128xf32>
    %194 = arith.addf %193, %192 : vector<8x128xf32>
    %195 = arith.divf %193, %194 : vector<8x128xf32>
    %196 = vector.extract_strided_slice %189 {offsets = [0, 128], sizes = [8, 128], strides = [1, 1]} : vector<8x512xf32> to vector<8x128xf32>
    %197 = arith.negf %196 : vector<8x128xf32>
    %198 = math.exp %197 : vector<8x128xf32>
    %cst_40 = arith.constant 1.000000e+00 : f32
    %199 = vector.broadcast %cst_40 : f32 to vector<8x128xf32>
    %200 = arith.addf %199, %198 : vector<8x128xf32>
    %201 = arith.divf %199, %200 : vector<8x128xf32>
    %202 = vector.extract_strided_slice %189 {offsets = [0, 256], sizes = [8, 128], strides = [1, 1]} : vector<8x512xf32> to vector<8x128xf32>
    %203 = math.tanh %202 : vector<8x128xf32>
    %204 = vector.extract_strided_slice %189 {offsets = [0, 384], sizes = [8, 128], strides = [1, 1]} : vector<8x512xf32> to vector<8x128xf32>
    %205 = arith.negf %204 : vector<8x128xf32>
    %206 = math.exp %205 : vector<8x128xf32>
    %cst_41 = arith.constant 1.000000e+00 : f32
    %207 = vector.broadcast %cst_41 : f32 to vector<8x128xf32>
    %208 = arith.addf %207, %206 : vector<8x128xf32>
    %209 = arith.divf %207, %208 : vector<8x128xf32>
    %210 = arith.mulf %201, %177 : vector<8x128xf32>
    %211 = arith.mulf %195, %203 : vector<8x128xf32>
    %212 = arith.addf %210, %211 : vector<8x128xf32>
    %213 = math.tanh %212 : vector<8x128xf32>
    %214 = arith.mulf %209, %213 : vector<8x128xf32>
    %c6_i32 = arith.constant 6 : i32
    %215 = arith.index_cast %c6_i32 : i32 to index
    %c0_42 = arith.constant 0 : index
    %c0_43 = arith.constant 0 : index
    %216 = vector.load %arg1[%215, %c0_42, %c0_43] : memref<8x8x1xf32, #tpu.memory_space<vmem>>, vector<1x8x1xf32>
    %217 = vector.shape_cast %216 : vector<1x8x1xf32> to vector<8x1xf32>
    %cst_44 = arith.constant dense<0.000000e+00> : vector<8x512xf32>
    %218 = tpu.matmul %214, %1, %cst_44 {dimension_numbers = #tpu.dot_dimension_numbers<[1], [0], [0], [1], [0, 0, 1, 1], [], []>} : vector<8x128xf32>, vector<128x512xf32>, vector<8x512xf32> -> vector<8x512xf32>
    %219 = vector.broadcast %217 : vector<8x1xf32> to vector<8x512xf32>
    %220 = vector.broadcast %0 : vector<1x512xf32> to vector<8x512xf32>
    %221 = arith.mulf %219, %220 : vector<8x512xf32>
    %222 = arith.addf %218, %221 : vector<8x512xf32>
    %223 = vector.broadcast %2 : vector<1x512xf32> to vector<8x512xf32>
    %224 = arith.addf %222, %223 : vector<8x512xf32>
    %225 = vector.extract_strided_slice %224 {offsets = [0, 0], sizes = [8, 128], strides = [1, 1]} : vector<8x512xf32> to vector<8x128xf32>
    %226 = arith.negf %225 : vector<8x128xf32>
    %227 = math.exp %226 : vector<8x128xf32>
    %cst_45 = arith.constant 1.000000e+00 : f32
    %228 = vector.broadcast %cst_45 : f32 to vector<8x128xf32>
    %229 = arith.addf %228, %227 : vector<8x128xf32>
    %230 = arith.divf %228, %229 : vector<8x128xf32>
    %231 = vector.extract_strided_slice %224 {offsets = [0, 128], sizes = [8, 128], strides = [1, 1]} : vector<8x512xf32> to vector<8x128xf32>
    %232 = arith.negf %231 : vector<8x128xf32>
    %233 = math.exp %232 : vector<8x128xf32>
    %cst_46 = arith.constant 1.000000e+00 : f32
    %234 = vector.broadcast %cst_46 : f32 to vector<8x128xf32>
    %235 = arith.addf %234, %233 : vector<8x128xf32>
    %236 = arith.divf %234, %235 : vector<8x128xf32>
    %237 = vector.extract_strided_slice %224 {offsets = [0, 256], sizes = [8, 128], strides = [1, 1]} : vector<8x512xf32> to vector<8x128xf32>
    %238 = math.tanh %237 : vector<8x128xf32>
    %239 = vector.extract_strided_slice %224 {offsets = [0, 384], sizes = [8, 128], strides = [1, 1]} : vector<8x512xf32> to vector<8x128xf32>
    %240 = arith.negf %239 : vector<8x128xf32>
    %241 = math.exp %240 : vector<8x128xf32>
    %cst_47 = arith.constant 1.000000e+00 : f32
    %242 = vector.broadcast %cst_47 : f32 to vector<8x128xf32>
    %243 = arith.addf %242, %241 : vector<8x128xf32>
    %244 = arith.divf %242, %243 : vector<8x128xf32>
    %245 = arith.mulf %236, %212 : vector<8x128xf32>
    %246 = arith.mulf %230, %238 : vector<8x128xf32>
    %247 = arith.addf %245, %246 : vector<8x128xf32>
    %248 = math.tanh %247 : vector<8x128xf32>
    %249 = arith.mulf %244, %248 : vector<8x128xf32>
    %c7_i32 = arith.constant 7 : i32
    %250 = arith.index_cast %c7_i32 : i32 to index
    %c0_48 = arith.constant 0 : index
    %c0_49 = arith.constant 0 : index
    %251 = vector.load %arg1[%250, %c0_48, %c0_49] : memref<8x8x1xf32, #tpu.memory_space<vmem>>, vector<1x8x1xf32>
    %252 = vector.shape_cast %251 : vector<1x8x1xf32> to vector<8x1xf32>
    %cst_50 = arith.constant dense<0.000000e+00> : vector<8x512xf32>
    %253 = tpu.matmul %249, %1, %cst_50 {dimension_numbers = #tpu.dot_dimension_numbers<[1], [0], [0], [1], [0, 0, 1, 1], [], []>} : vector<8x128xf32>, vector<128x512xf32>, vector<8x512xf32> -> vector<8x512xf32>
    %254 = vector.broadcast %252 : vector<8x1xf32> to vector<8x512xf32>
    %255 = vector.broadcast %0 : vector<1x512xf32> to vector<8x512xf32>
    %256 = arith.mulf %254, %255 : vector<8x512xf32>
    %257 = arith.addf %253, %256 : vector<8x512xf32>
    %258 = vector.broadcast %2 : vector<1x512xf32> to vector<8x512xf32>
    %259 = arith.addf %257, %258 : vector<8x512xf32>
    %260 = vector.extract_strided_slice %259 {offsets = [0, 0], sizes = [8, 128], strides = [1, 1]} : vector<8x512xf32> to vector<8x128xf32>
    %261 = arith.negf %260 : vector<8x128xf32>
    %262 = math.exp %261 : vector<8x128xf32>
    %cst_51 = arith.constant 1.000000e+00 : f32
    %263 = vector.broadcast %cst_51 : f32 to vector<8x128xf32>
    %264 = arith.addf %263, %262 : vector<8x128xf32>
    %265 = arith.divf %263, %264 : vector<8x128xf32>
    %266 = vector.extract_strided_slice %259 {offsets = [0, 128], sizes = [8, 128], strides = [1, 1]} : vector<8x512xf32> to vector<8x128xf32>
    %267 = arith.negf %266 : vector<8x128xf32>
    %268 = math.exp %267 : vector<8x128xf32>
    %cst_52 = arith.constant 1.000000e+00 : f32
    %269 = vector.broadcast %cst_52 : f32 to vector<8x128xf32>
    %270 = arith.addf %269, %268 : vector<8x128xf32>
    %271 = arith.divf %269, %270 : vector<8x128xf32>
    %272 = vector.extract_strided_slice %259 {offsets = [0, 256], sizes = [8, 128], strides = [1, 1]} : vector<8x512xf32> to vector<8x128xf32>
    %273 = math.tanh %272 : vector<8x128xf32>
    %274 = vector.extract_strided_slice %259 {offsets = [0, 384], sizes = [8, 128], strides = [1, 1]} : vector<8x512xf32> to vector<8x128xf32>
    %275 = arith.negf %274 : vector<8x128xf32>
    %276 = math.exp %275 : vector<8x128xf32>
    %cst_53 = arith.constant 1.000000e+00 : f32
    %277 = vector.broadcast %cst_53 : f32 to vector<8x128xf32>
    %278 = arith.addf %277, %276 : vector<8x128xf32>
    %279 = arith.divf %277, %278 : vector<8x128xf32>
    %280 = arith.mulf %271, %247 : vector<8x128xf32>
    %281 = arith.mulf %265, %273 : vector<8x128xf32>
    %282 = arith.addf %280, %281 : vector<8x128xf32>
    %283 = math.tanh %282 : vector<8x128xf32>
    %284 = arith.mulf %279, %283 : vector<8x128xf32>
    %c8_i32 = arith.constant 8 : i32
    %c0_54 = arith.constant 0 : index
    %c0_55 = arith.constant 0 : index
    %285 = vector.load %arg5[%c0_54, %c0_55] : memref<128x128xf32, #tpu.memory_space<vmem>>, vector<128x128xf32>
    %cst_56 = arith.constant dense<0.000000e+00> : vector<8x128xf32>
    %286 = tpu.matmul %284, %285, %cst_56 {dimension_numbers = #tpu.dot_dimension_numbers<[1], [0], [0], [1], [0, 0, 1, 1], [], []>} : vector<8x128xf32>, vector<128x128xf32>, vector<8x128xf32> -> vector<8x128xf32>
    %c0_57 = arith.constant 0 : index
    %c0_58 = arith.constant 0 : index
    %287 = vector.load %arg6[%c0_57, %c0_58] : memref<1x128xf32, #tpu.memory_space<vmem>>, vector<1x128xf32>
    %288 = vector.broadcast %287 : vector<1x128xf32> to vector<8x128xf32>
    %289 = arith.addf %286, %288 : vector<8x128xf32>
    %c0_59 = arith.constant 0 : index
    %c0_60 = arith.constant 0 : index
    %290 = vector.load %arg7[%c0_59, %c0_60] : memref<8x128xf32, #tpu.memory_space<vmem>>, vector<8x128xf32>
    tpu.vector_store %arg7[%c0_59, %c0_60], %289 {strides = array<i32>} : memref<8x128xf32, #tpu.memory_space<vmem>>, vector<8x128xf32>,
    return
  }
  func.func @transform_0(%arg0: i32) -> (i32, i32, i32) {
    %c0_i32 = arith.constant 0 : i32
    %c0_i32_0 = arith.constant 0 : i32
    %c0_i32_1 = arith.constant 0 : i32
    return %c0_i32, %arg0, %c0_i32_0 : i32, i32, i32
  }
  func.func @transform_1(%arg0: i32) -> (i32, i32) {
    %c0_i32 = arith.constant 0 : i32
    %c0_i32_0 = arith.constant 0 : i32
    %c0_i32_1 = arith.constant 0 : i32
    return %c0_i32, %c0_i32_0 : i32, i32
  }
  func.func @transform_2(%arg0: i32) -> (i32, i32) {
    %c0_i32 = arith.constant 0 : i32
    %c0_i32_0 = arith.constant 0 : i32
    %c0_i32_1 = arith.constant 0 : i32
    return %c0_i32, %c0_i32_0 : i32, i32
  }
  func.func @transform_3(%arg0: i32) -> (i32, i32) {
    %c0_i32 = arith.constant 0 : i32
    %c0_i32_0 = arith.constant 0 : i32
    %c0_i32_1 = arith.constant 0 : i32
    return %c0_i32, %c0_i32_0 : i32, i32
  }
  func.func @transform_4(%arg0: i32) -> (i32, i32) {
    %c0_i32 = arith.constant 0 : i32
    %c0_i32_0 = arith.constant 0 : i32
    %c0_i32_1 = arith.constant 0 : i32
    return %c0_i32, %c0_i32_0 : i32, i32
  }
  func.func @transform_5(%arg0: i32) -> (i32, i32) {
    %c0_i32 = arith.constant 0 : i32
    %c0_i32_0 = arith.constant 0 : i32
    %c0_i32_1 = arith.constant 0 : i32
    return %c0_i32, %c0_i32_0 : i32, i32
  }
  func.func @transform_6(%arg0: i32) -> (i32, i32) {
    %c0_i32 = arith.constant 0 : i32
    %c0_i32_0 = arith.constant 0 : i32
    return %arg0, %c0_i32 : i32, i32
  }
}

</mosaic_0001>

<llo_original>
// kernel: tpu_custom_call.1
$region0: #{tpu_custom_call.1}
  #allocation0 [shape = 'u32[]', space=smem, size = 0x4, offset = 0x4, fixed_abs, tag = 'smem constant byte address 0x4 - core index']
  #allocation1 [shape = 'u32[72,128]{1,0:T(1,128)}', space=vmem, size = 0x9000, scoped, tag = 'internal scratch']
  %s0 = inlined_call_operand.vmem [shape: f32[8,8,1], index: 0, kind: input, shape index: {}]
  %s1 = inlined_call_operand.vmem [shape: f32[1,512], index: 1, kind: input, shape index: {}]
  %s2 = inlined_call_operand.hbm [shape: f32[128,512], index: 2, kind: input, shape index: {}]
  %s3 = inlined_call_operand.vmem [shape: f32[1,512], index: 3, kind: input, shape index: {}]
  %s4 = inlined_call_operand.hbm [shape: f32[128,128], index: 4, kind: input, shape index: {}]
  %s5 = inlined_call_operand.vmem [shape: f32[1,128], index: 5, kind: input, shape index: {}]
  %s6 = inlined_call_operand.hbm [shape: f32[8,128], index: 6, kind: output, shape index: {}]
  %s7 = sld [smem:[#allocation0]]
  $region42: #{tpu_custom_call.1} parent=0
    _
  %s9 = ssub.s32 1, %s7
  %s10 = scalar_select 0, %s9, %s7
  $region1: #{tpu_custom_call.1} parent=0
    #allocation2 [shape = 'u8[262144]{0}', space=vmem, size = 0x40000, scoped, tag = 'input window, operand 2, single buffered']
    #allocation3 [shape = 's32[1]{0}', space=sflag, size = 0x4, scoped, tag = 'scoped memory for tpu_custom_call.1']
    #allocation4 [shape = 's32[1]{0}', space=sflag, size = 0x4, scoped, tag = 'scoped memory for tpu_custom_call.1']
    #allocation5 [shape = 'u8[65536]{0}', space=vmem, size = 0x10000, scoped, tag = 'input window, operand 4, single buffered']
    #allocation6 [shape = 's32[1]{0}', space=sflag, size = 0x4, scoped, tag = 'scoped memory for tpu_custom_call.1']
    #allocation7 [shape = 'u8[4096]{0}', space=vmem, size = 0x1000, scoped, tag = 'output window, operand 0, single buffered']
    %11 = vsyncpa [#allocation3], 0
    %12 = vsyncpa [#allocation6], 0
    %13 = vsyncpa [#allocation4], 0
    // Predicated region
    $region2: #{tpu_custom_call.1} parent=1 // pred_check
      _
    $region3: #{tpu_custom_call.1} parent=1 // pred_check_branch
      %15 = sbr.rel (0) target = $region5
    $region4: #{tpu_custom_call.1} parent=1 // pred_region
      _
    $region5: #{tpu_custom_call.1} parent=1 // pred_fallthru
      _
    // Predicated region
    $region6: #{tpu_custom_call.1} parent=1 // pred_check
      _
    $region7: #{tpu_custom_call.1} parent=1 // pred_check_branch
      %17 = sbr.rel (0) target = $region9
    $region8: #{tpu_custom_call.1} parent=1 // pred_region
      _
    $region9: #{tpu_custom_call.1} parent=1 // pred_fallthru
      _
    // Predicated region
    $region10: #{tpu_custom_call.1} parent=1 // pred_check
      _
    $region11: #{tpu_custom_call.1} parent=1 // pred_check_branch
      %19 = sbr.rel (0) target = $region13
    $region12: #{tpu_custom_call.1} parent=1 // pred_region
      %21 = vsyncadd [#allocation3], 0
      %s22 = sshll.u32 %s2, 4
      %s23 = int_to_ptr.hbm [resolvable:$true] %s22
      %s24 = sshll.u32 [#allocation2], 4
      %s25 = int_to_ptr.vmem [resolvable:$true] %s24
      %30 = dma.hbm_to_vmem [thread:$0]  %s23, 8192, %s25, [#allocation3], 512, 512, 32
    $region13: #{tpu_custom_call.1} parent=1 // pred_fallthru
      _
    // Predicated region
    $region14: #{tpu_custom_call.1} parent=1 // pred_check
      _
    $region15: #{tpu_custom_call.1} parent=1 // pred_check_branch
      %32 = sbr.rel (0) target = $region17
    $region16: #{tpu_custom_call.1} parent=1 // pred_region
      _
    $region17: #{tpu_custom_call.1} parent=1 // pred_fallthru
      _
    // Predicated region
    $region18: #{tpu_custom_call.1} parent=1 // pred_check
      _
    $region19: #{tpu_custom_call.1} parent=1 // pred_check_branch
      %34 = sbr.rel (0) target = $region21
    $region20: #{tpu_custom_call.1} parent=1 // pred_region
      %36 = vsyncadd [#allocation6], 0
      %s37 = sshll.u32 %s4, 4
      %s38 = int_to_ptr.hbm [resolvable:$true] %s37
      %s39 = sshll.u32 [#allocation5], 4
      %s40 = int_to_ptr.vmem [resolvable:$true] %s39
      %45 = dma.hbm_to_vmem [thread:$0]  %s38, 2048, %s40, [#allocation6], 128, 128, 8
    $region21: #{tpu_custom_call.1} parent=1 // pred_fallthru
      _
    // Predicated region
    $region22: #{tpu_custom_call.1} parent=1 // pred_check
      _
    $region23: #{tpu_custom_call.1} parent=1 // pred_check_branch
      %47 = sbr.rel (0) target = $region25
    $region24: #{tpu_custom_call.1} parent=1 // pred_region
      _
    $region25: #{tpu_custom_call.1} parent=1 // pred_fallthru
      _
    // Predicated region
    $region26: #{tpu_custom_call.1} parent=1 // pred_check
      _
    $region27: #{tpu_custom_call.1} parent=1 // pred_check_branch
      %49 = sbr.rel (0) target = $region29
    $region28: #{tpu_custom_call.1} parent=1 // pred_region
      %51 = dma.done [#allocation3], 8192
    $region29: #{tpu_custom_call.1} parent=1 // pred_fallthru
      _
    // Predicated region
    $region30: #{tpu_custom_call.1} parent=1 // pred_check
      _
    $region31: #{tpu_custom_call.1} parent=1 // pred_check_branch
      %53 = sbr.rel (0) target = $region33
    $region32: #{tpu_custom_call.1} parent=1 // pred_region
      %55 = dma.done [#allocation6], 2048
    $region33: #{tpu_custom_call.1} parent=1 // pred_fallthru
      _
    %v56 = vld [vmem:[%s1] sm:$0xf]
    %v57 = vld [vmem:[#allocation2] sm:$0xff]
    %v58 = vld [vmem:[#allocation2 + $0x8] sm:$0xff]
    %v59 = vld [vmem:[#allocation2 + $0x10] sm:$0xff]
    %v60 = vld [vmem:[#allocation2 + $0x18] sm:$0xff]
    %v61 = vld [vmem:[#allocation2 + $0x20] sm:$0xff]
    %v62 = vld [vmem:[#allocation2 + $0x28] sm:$0xff]
    %v63 = vld [vmem:[#allocation2 + $0x30] sm:$0xff]
    %v64 = vld [vmem:[#allocation2 + $0x38] sm:$0xff]
    %v65 = vld [vmem:[#allocation2 + $0x40] sm:$0xff]
    %v66 = vld [vmem:[#allocation2 + $0x48] sm:$0xff]
    %v67 = vld [vmem:[#allocation2 + $0x50] sm:$0xff]
    %v68 = vld [vmem:[#allocation2 + $0x58] sm:$0xff]
    %v69 = vld [vmem:[#allocation2 + $0x60] sm:$0xff]
    %v70 = vld [vmem:[#allocation2 + $0x68] sm:$0xff]
    %v71 = vld [vmem:[#allocation2 + $0x70] sm:$0xff]
    %v72 = vld [vmem:[#allocation2 + $0x78] sm:$0xff]
    %v73 = vld [vmem:[#allocation2 + $0x80] sm:$0xff]
    %v74 = vld [vmem:[#allocation2 + $0x88] sm:$0xff]
    %v75 = vld [vmem:[#allocation2 + $0x90] sm:$0xff]
    %v76 = vld [vmem:[#allocation2 + $0x98] sm:$0xff]
    %v77 = vld [vmem:[#allocation2 + $0xa0] sm:$0xff]
    %v78 = vld [vmem:[#allocation2 + $0xa8] sm:$0xff]
    %v79 = vld [vmem:[#allocation2 + $0xb0] sm:$0xff]
    %v80 = vld [vmem:[#allocation2 + $0xb8] sm:$0xff]
    %v81 = vld [vmem:[#allocation2 + $0xc0] sm:$0xff]
    %v82 = vld [vmem:[#allocation2 + $0xc8] sm:$0xff]
    %v83 = vld [vmem:[#allocation2 + $0xd0] sm:$0xff]
    %v84 = vld [vmem:[#allocation2 + $0xd8] sm:$0xff]
    %v85 = vld [vmem:[#allocation2 + $0xe0] sm:$0xff]
    %v86 = vld [vmem:[#allocation2 + $0xe8] sm:$0xff]
    %v87 = vld [vmem:[#allocation2 + $0xf0] sm:$0xff]
    %v88 = vld [vmem:[#allocation2 + $0xf8] sm:$0xff]
    %v89 = vld [vmem:[#allocation2 + $0x100] sm:$0xff]
    %v90 = vld [vmem:[#allocation2 + $0x108] sm:$0xff]
    %v91 = vld [vmem:[#allocation2 + $0x110] sm:$0xff]
    %v92 = vld [vmem:[#allocation2 + $0x118] sm:$0xff]
    %v93 = vld [vmem:[#allocation2 + $0x120] sm:$0xff]
    %v94 = vld [vmem:[#allocation2 + $0x128] sm:$0xff]
    %v95 = vld [vmem:[#allocation2 + $0x130] sm:$0xff]
    %v96 = vld [vmem:[#allocation2 + $0x138] sm:$0xff]
    %v97 = vld [vmem:[#allocation2 + $0x140] sm:$0xff]
    %v98 = vld [vmem:[#allocation2 + $0x148] sm:$0xff]
    %v99 = vld [vmem:[#allocation2 + $0x150] sm:$0xff]
    %v100 = vld [vmem:[#allocation2 + $0x158] sm:$0xff]
    %v101 = vld [vmem:[#allocation2 + $0x160] sm:$0xff]
    %v102 = vld [vmem:[#allocation2 + $0x168] sm:$0xff]
    %v103 = vld [vmem:[#allocation2 + $0x170] sm:$0xff]
    %v104 = vld [vmem:[#allocation2 + $0x178] sm:$0xff]
    %v105 = vld [vmem:[#allocation2 + $0x180] sm:$0xff]
    %v106 = vld [vmem:[#allocation2 + $0x188] sm:$0xff]
    %v107 = vld [vmem:[#allocation2 + $0x190] sm:$0xff]
    %v108 = vld [vmem:[#allocation2 + $0x198] sm:$0xff]
    %v109 = vld [vmem:[#allocation2 + $0x1a0] sm:$0xff]
    %v110 = vld [vmem:[#allocation2 + $0x1a8] sm:$0xff]
    %v111 = vld [vmem:[#allocation2 + $0x1b0] sm:$0xff]
    %v112 = vld [vmem:[#allocation2 + $0x1b8] sm:$0xff]
    %v113 = vld [vmem:[#allocation2 + $0x1c0] sm:$0xff]
    %v114 = vld [vmem:[#allocation2 + $0x1c8] sm:$0xff]
    %v115 = vld [vmem:[#allocation2 + $0x1d0] sm:$0xff]
    %v116 = vld [vmem:[#allocation2 + $0x1d8] sm:$0xff]
    %v117 = vld [vmem:[#allocation2 + $0x1e0] sm:$0xff]
    %v118 = vld [vmem:[#allocation2 + $0x1e8] sm:$0xff]
    %v119 = vld [vmem:[#allocation2 + $0x1f0] sm:$0xff]
    %v120 = vld [vmem:[#allocation2 + $0x1f8] sm:$0xff]
    %v121 = vld [vmem:[%s3] sm:$0xf]
    %v122 = vld [vmem:[%s0] sm:$0xff]
    %124 = vset.pattern.permute.xlu0 0
    %125 = vperm.xlu0 %124, %v122
    %v126 = vpop.permute.xlu0 %125
    %v129 = vperm.slane %v56, 0
    %v130 = vperm.slane %v56, 1
    %v131 = vperm.slane %v56, 2
    %v132 = vperm.slane %v56, 3
    %v137 = vmul.f32 %v126, %v129
    %v138 = vmul.f32 %v126, %v130
    %v139 = vmul.f32 %v126, %v131
    %v140 = vmul.f32 %v126, %v132
    %141 = vmatpush.msra.mxu0 %v117
    %142 = vmatpush.msra.mxu0 %v113
    %143 = vmatpush.msra.mxu0 %v109
    %144 = vmatpush.msra.mxu0 %v105
    %145 = vmatpush.msra.mxu0 %v101
    %146 = vmatpush.msra.mxu0 %v97
    %147 = vmatpush.msra.mxu0 %v93
    %148 = vmatpush.msra.mxu0 %v89
    %149 = vmatpush.msra.mxu0 %v85
    %150 = vmatpush.msra.mxu0 %v81
    %151 = vmatpush.msra.mxu0 %v77
    %152 = vmatpush.msra.mxu0 %v73
    %153 = vmatpush.msra.mxu0 %v69
    %154 = vmatpush.msra.mxu0 %v65
    %155 = vmatpush.msra.mxu0 %v61
    %156 = vmatpush.msra.mxu0 %v57
    %157 = vmatmul.f32.gmra.mxu0 0.0
    %v158 = vpop.f32.mrf.mxu0
    %v159 = vadd.f32 %v137, %v158
    %160 = vdwg.mxu0
    %161 = vmatpush.msra.mxu0 %v118
    %162 = vmatpush.msra.mxu0 %v114
    %163 = vmatpush.msra.mxu0 %v110
    %164 = vmatpush.msra.mxu0 %v106
    %165 = vmatpush.msra.mxu0 %v102
    %166 = vmatpush.msra.mxu0 %v98
    %167 = vmatpush.msra.mxu0 %v94
    %168 = vmatpush.msra.mxu0 %v90
    %169 = vmatpush.msra.mxu0 %v86
    %170 = vmatpush.msra.mxu0 %v82
    %171 = vmatpush.msra.mxu0 %v78
    %172 = vmatpush.msra.mxu0 %v74
    %173 = vmatpush.msra.mxu0 %v70
    %174 = vmatpush.msra.mxu0 %v66
    %175 = vmatpush.msra.mxu0 %v62
    %176 = vmatpush.msra.mxu0 %v58
    %177 = vmatmul.f32.gmra.mxu0 0.0
    %v178 = vpop.f32.mrf.mxu0
    %v179 = vadd.f32 %v138, %v178
    %180 = vdwg.mxu0
    %181 = vmatpush.msra.mxu0 %v119
    %182 = vmatpush.msra.mxu0 %v115
    %183 = vmatpush.msra.mxu0 %v111
    %184 = vmatpush.msra.mxu0 %v107
    %185 = vmatpush.msra.mxu0 %v103
    %186 = vmatpush.msra.mxu0 %v99
    %187 = vmatpush.msra.mxu0 %v95
    %188 = vmatpush.msra.mxu0 %v91
    %189 = vmatpush.msra.mxu0 %v87
    %190 = vmatpush.msra.mxu0 %v83
    %191 = vmatpush.msra.mxu0 %v79
    %192 = vmatpush.msra.mxu0 %v75
    %193 = vmatpush.msra.mxu0 %v71
    %194 = vmatpush.msra.mxu0 %v67
    %195 = vmatpush.msra.mxu0 %v63
    %196 = vmatpush.msra.mxu0 %v59
    %197 = vmatmul.f32.gmra.mxu0 0.0
    %v198 = vpop.f32.mrf.mxu0
    %v199 = vadd.f32 %v139, %v198
    %200 = vdwg.mxu0
    %201 = vmatpush.msra.mxu0 %v120
    %202 = vmatpush.msra.mxu0 %v116
    %203 = vmatpush.msra.mxu0 %v112
    %204 = vmatpush.msra.mxu0 %v108
    %205 = vmatpush.msra.mxu0 %v104
    %206 = vmatpush.msra.mxu0 %v100
    %207 = vmatpush.msra.mxu0 %v96
    %208 = vmatpush.msra.mxu0 %v92
    %209 = vmatpush.msra.mxu0 %v88
    %210 = vmatpush.msra.mxu0 %v84
    %211 = vmatpush.msra.mxu0 %v80
    %212 = vmatpush.msra.mxu0 %v76
    %213 = vmatpush.msra.mxu0 %v72
    %214 = vmatpush.msra.mxu0 %v68
    %215 = vmatpush.msra.mxu0 %v64
    %216 = vmatpush.msra.mxu0 %v60
    %217 = vmatmul.f32.gmra.mxu0 0.0
    %v218 = vpop.f32.mrf.mxu0
    %v219 = vadd.f32 %v140, %v218
    %220 = vdwg.mxu0
    %v222 = vperm.slane %v121, 0
    %v223 = vperm.slane %v121, 1
    %v224 = vperm.slane %v121, 2
    %v225 = vperm.slane %v121, 3
    %v230 = vadd.f32 %v159, %v222
    %v231 = vadd.f32 %v179, %v223
    %v232 = vadd.f32 %v199, %v224
    %v233 = vadd.f32 %v219, %v225
    %v234 = vxor.u32 %v230, 2147483648
    %v235 = vmul.f32 %v234, 1.442695
    %v236 = vpow.pop %v235
    %v237 = vadd.f32 %v236, 1.0
    %v238 = vrcp.pop %v237
    %v239 = vmul.f32 %v237, %v238
    %v240 = vsub.f32 1.0, %v239
    %v241 = vmul.f32 %v238, %v240
    %v242 = vadd.f32 %v238, %v241
    %vm243 = vweird.f32 %v237
    %vm244 = vweird.f32 %v238
    %vm245 = vmor %vm243, %vm244
    %v246 = vsel %vm245, %v238, %v242
    %v247 = vand.u32 2147483647, %v237
    %vm248 = vcmp.eq.f32.partialorder %v247, 8.507059e+37
    %v249 = vand.u32 %v237, 2147483648
    %v250 = vor.u32 1.1754944e-38, %v249
    %v251 = vsel %vm248, %v250, %v246
    %v252 = vmul.f32 1.0, %v251
    %v253 = vxor.u32 %v231, 2147483648
    %v254 = vmul.f32 %v253, 1.442695
    %v255 = vpow.pop %v254
    %v256 = vadd.f32 %v255, 1.0
    %v257 = vrcp.pop %v256
    %v258 = vmul.f32 %v256, %v257
    %v259 = vsub.f32 1.0, %v258
    %v260 = vmul.f32 %v257, %v259
    %v261 = vadd.f32 %v257, %v260
    %vm262 = vweird.f32 %v256
    %vm263 = vweird.f32 %v257
    %vm264 = vmor %vm262, %vm263
    %v265 = vsel %vm264, %v257, %v261
    %v266 = vand.u32 2147483647, %v256
    %vm267 = vcmp.eq.f32.partialorder %v266, 8.507059e+37
    %v268 = vand.u32 %v256, 2147483648
    %v269 = vor.u32 1.1754944e-38, %v268
    %v270 = vsel %vm267, %v269, %v265
    %v271 = vmul.f32 1.0, %v270
    %v272 = vtanh.pop %v232
    %v273 = vxor.u32 %v233, 2147483648
    %v274 = vmul.f32 %v273, 1.442695
    %v275 = vpow.pop %v274
    %v276 = vadd.f32 %v275, 1.0
    %v277 = vrcp.pop %v276
    %v278 = vmul.f32 %v276, %v277
    %v279 = vsub.f32 1.0, %v278
    %v280 = vmul.f32 %v277, %v279
    %v281 = vadd.f32 %v277, %v280
    %vm282 = vweird.f32 %v276
    %vm283 = vweird.f32 %v277
    %vm284 = vmor %vm282, %vm283
    %v285 = vsel %vm284, %v277, %v281
    %v286 = vand.u32 2147483647, %v276
    %vm287 = vcmp.eq.f32.partialorder %v286, 8.507059e+37
    %v288 = vand.u32 %v276, 2147483648
    %v289 = vor.u32 1.1754944e-38, %v288
    %v290 = vsel %vm287, %v289, %v285
    %v291 = vmul.f32 1.0, %v290
    %v292 = vmul.f32 %v271, 0.0
    %v293 = vmul.f32 %v252, %v272
    %v294 = vadd.f32 %v292, %v293
    %v295 = vtanh.pop %v294
    %v296 = vmul.f32 %v291, %v295
    %s297 = scalar_lea.vmem %s0, 8
    %v298 = vld [vmem:[%s297] sm:$0xff]
    %300 = vset.pattern.permute.xlu0 0
    %301 = vperm.xlu0 %300, %v298
    %v302 = vpop.permute.xlu0 %301
    %v304 = vmul.f32 %v302, %v129
    %v305 = vmul.f32 %v302, %v130
    %v306 = vmul.f32 %v302, %v131
    %v307 = vmul.f32 %v302, %v132
    %308 = vmatpush.msra.mxu0 %v117
    %309 = vmatpush.msra.mxu0 %v113
    %310 = vmatpush.msra.mxu0 %v109
    %311 = vmatpush.msra.mxu0 %v105
    %312 = vmatpush.msra.mxu0 %v101
    %313 = vmatpush.msra.mxu0 %v97
    %314 = vmatpush.msra.mxu0 %v93
    %315 = vmatpush.msra.mxu0 %v89
    %316 = vmatpush.msra.mxu0 %v85
    %317 = vmatpush.msra.mxu0 %v81
    %318 = vmatpush.msra.mxu0 %v77
    %319 = vmatpush.msra.mxu0 %v73
    %320 = vmatpush.msra.mxu0 %v69
    %321 = vmatpush.msra.mxu0 %v65
    %322 = vmatpush.msra.mxu0 %v61
    %323 = vmatpush.msra.mxu0 %v57
    %324 = vmatmul.f32.gmra.mxu0 %v296
    %v325 = vpop.f32.mrf.mxu0
    %v326 = vadd.f32 %v304, %v325
    %327 = vdwg.mxu0
    %328 = vmatpush.msra.mxu0 %v118
    %329 = vmatpush.msra.mxu0 %v114
    %330 = vmatpush.msra.mxu0 %v110
    %331 = vmatpush.msra.mxu0 %v106
    %332 = vmatpush.msra.mxu0 %v102
    %333 = vmatpush.msra.mxu0 %v98
    %334 = vmatpush.msra.mxu0 %v94
    %335 = vmatpush.msra.mxu0 %v90
    %336 = vmatpush.msra.mxu0 %v86
    %337 = vmatpush.msra.mxu0 %v82
    %338 = vmatpush.msra.mxu0 %v78
    %339 = vmatpush.msra.mxu0 %v74
    %340 = vmatpush.msra.mxu0 %v70
    %341 = vmatpush.msra.mxu0 %v66
    %342 = vmatpush.msra.mxu0 %v62
    %343 = vmatpush.msra.mxu0 %v58
    %344 = vmatmul.f32.gmra.mxu0 %v296
    %v345 = vpop.f32.mrf.mxu0
    %v346 = vadd.f32 %v305, %v345
    %347 = vdwg.mxu0
    %348 = vmatpush.msra.mxu0 %v119
    %349 = vmatpush.msra.mxu0 %v115
    %350 = vmatpush.msra.mxu0 %v111
    %351 = vmatpush.msra.mxu0 %v107
    %352 = vmatpush.msra.mxu0 %v103
    %353 = vmatpush.msra.mxu0 %v99
    %354 = vmatpush.msra.mxu0 %v95
    %355 = vmatpush.msra.mxu0 %v91
    %356 = vmatpush.msra.mxu0 %v87
    %357 = vmatpush.msra.mxu0 %v83
    %358 = vmatpush.msra.mxu0 %v79
    %359 = vmatpush.msra.mxu0 %v75
    %360 = vmatpush.msra.mxu0 %v71
    %361 = vmatpush.msra.mxu0 %v67
    %362 = vmatpush.msra.mxu0 %v63
    %363 = vmatpush.msra.mxu0 %v59
    %364 = vmatmul.f32.gmra.mxu0 %v296
    %v365 = vpop.f32.mrf.mxu0
    %v366 = vadd.f32 %v306, %v365
    %367 = vdwg.mxu0
    %368 = vmatpush.msra.mxu0 %v120
    %369 = vmatpush.msra.mxu0 %v116
    %370 = vmatpush.msra.mxu0 %v112
    %371 = vmatpush.msra.mxu0 %v108
    %372 = vmatpush.msra.mxu0 %v104
    %373 = vmatpush.msra.mxu0 %v100
    %374 = vmatpush.msra.mxu0 %v96
    %375 = vmatpush.msra.mxu0 %v92
    %376 = vmatpush.msra.mxu0 %v88
    %377 = vmatpush.msra.mxu0 %v84
    %378 = vmatpush.msra.mxu0 %v80
    %379 = vmatpush.msra.mxu0 %v76
    %380 = vmatpush.msra.mxu0 %v72
    %381 = vmatpush.msra.mxu0 %v68
    %382 = vmatpush.msra.mxu0 %v64
    %383 = vmatpush.msra.mxu0 %v60
    %384 = vmatmul.f32.gmra.mxu0 %v296
    %v385 = vpop.f32.mrf.mxu0
    %v386 = vadd.f32 %v307, %v385
    %387 = vdwg.mxu0
    %v388 = vadd.f32 %v326, %v222
    %v389 = vadd.f32 %v346, %v223
    %v390 = vadd.f32 %v366, %v224
    %v391 = vadd.f32 %v386, %v225
    %v392 = vxor.u32 %v388, 2147483648
    %v393 = vmul.f32 %v392, 1.442695
    %v394 = vpow.pop %v393
    %v395 = vadd.f32 %v394, 1.0
    %v396 = vrcp.pop %v395
    %v397 = vmul.f32 %v395, %v396
    %v398 = vsub.f32 1.0, %v397
    %v399 = vmul.f32 %v396, %v398
    %v400 = vadd.f32 %v396, %v399
    %vm401 = vweird.f32 %v395
    %vm402 = vweird.f32 %v396
    %vm403 = vmor %vm401, %vm402
    %v404 = vsel %vm403, %v396, %v400
    %v405 = vand.u32 2147483647, %v395
    %vm406 = vcmp.eq.f32.partialorder %v405, 8.507059e+37
    %v407 = vand.u32 %v395, 2147483648
    %v408 = vor.u32 1.1754944e-38, %v407
    %v409 = vsel %vm406, %v408, %v404
    %v410 = vmul.f32 1.0, %v409
    %v411 = vxor.u32 %v389, 2147483648
    %v412 = vmul.f32 %v411, 1.442695
    %v413 = vpow.pop %v412
    %v414 = vadd.f32 %v413, 1.0
    %v415 = vrcp.pop %v414
    %v416 = vmul.f32 %v414, %v415
    %v417 = vsub.f32 1.0, %v416
    %v418 = vmul.f32 %v415, %v417
    %v419 = vadd.f32 %v415, %v418
    %vm420 = vweird.f32 %v414
    %vm421 = vweird.f32 %v415
    %vm422 = vmor %vm420, %vm421
    %v423 = vsel %vm422, %v415, %v419
    %v424 = vand.u32 2147483647, %v414
    %vm425 = vcmp.eq.f32.partialorder %v424, 8.507059e+37
    %v426 = vand.u32 %v414, 2147483648
    %v427 = vor.u32 1.1754944e-38, %v426
    %v428 = vsel %vm425, %v427, %v423
    %v429 = vmul.f32 1.0, %v428
    %v430 = vtanh.pop %v390
    %v431 = vxor.u32 %v391, 2147483648
    %v432 = vmul.f32 %v431, 1.442695
    %v433 = vpow.pop %v432
    %v434 = vadd.f32 %v433, 1.0
    %v435 = vrcp.pop %v434
    %v436 = vmul.f32 %v434, %v435
    %v437 = vsub.f32 1.0, %v436
    %v438 = vmul.f32 %v435, %v437
    %v439 = vadd.f32 %v435, %v438
    %vm440 = vweird.f32 %v434
    %vm441 = vweird.f32 %v435
    %vm442 = vmor %vm440, %vm441
    %v443 = vsel %vm442, %v435, %v439
    %v444 = vand.u32 2147483647, %v434
    %vm445 = vcmp.eq.f32.partialorder %v444, 8.507059e+37
    %v446 = vand.u32 %v434, 2147483648
    %v447 = vor.u32 1.1754944e-38, %v446
    %v448 = vsel %vm445, %v447, %v443
    %v449 = vmul.f32 1.0, %v448
    %v450 = vmul.f32 %v429, %v294
    %v451 = vmul.f32 %v410, %v430
    %v452 = vadd.f32 %v450, %v451
    %v453 = vtanh.pop %v452
    %v454 = vmul.f32 %v449, %v453
    %s455 = scalar_lea.vmem %s0, 16
    %v456 = vld [vmem:[%s455] sm:$0xff]
    %458 = vset.pattern.permute.xlu0 0
    %459 = vperm.xlu0 %458, %v456
    %v460 = vpop.permute.xlu0 %459
    %v462 = vmul.f32 %v460, %v129
    %v463 = vmul.f32 %v460, %v130
    %v464 = vmul.f32 %v460, %v131
    %v465 = vmul.f32 %v460, %v132
    %466 = vmatpush.msra.mxu0 %v117
    %467 = vmatpush.msra.mxu0 %v113
    %468 = vmatpush.msra.mxu0 %v109
    %469 = vmatpush.msra.mxu0 %v105
    %470 = vmatpush.msra.mxu0 %v101
    %471 = vmatpush.msra.mxu0 %v97
    %472 = vmatpush.msra.mxu0 %v93
    %473 = vmatpush.msra.mxu0 %v89
    %474 = vmatpush.msra.mxu0 %v85
    %475 = vmatpush.msra.mxu0 %v81
    %476 = vmatpush.msra.mxu0 %v77
    %477 = vmatpush.msra.mxu0 %v73
    %478 = vmatpush.msra.mxu0 %v69
    %479 = vmatpush.msra.mxu0 %v65
    %480 = vmatpush.msra.mxu0 %v61
    %481 = vmatpush.msra.mxu0 %v57
    %482 = vmatmul.f32.gmra.mxu0 %v454
    %v483 = vpop.f32.mrf.mxu0
    %v484 = vadd.f32 %v462, %v483
    %485 = vdwg.mxu0
    %486 = vmatpush.msra.mxu0 %v118
    %487 = vmatpush.msra.mxu0 %v114
    %488 = vmatpush.msra.mxu0 %v110
    %489 = vmatpush.msra.mxu0 %v106
    %490 = vmatpush.msra.mxu0 %v102
    %491 = vmatpush.msra.mxu0 %v98
    %492 = vmatpush.msra.mxu0 %v94
    %493 = vmatpush.msra.mxu0 %v90
    %494 = vmatpush.msra.mxu0 %v86
    %495 = vmatpush.msra.mxu0 %v82
    %496 = vmatpush.msra.mxu0 %v78
    %497 = vmatpush.msra.mxu0 %v74
    %498 = vmatpush.msra.mxu0 %v70
    %499 = vmatpush.msra.mxu0 %v66
    %500 = vmatpush.msra.mxu0 %v62
    %501 = vmatpush.msra.mxu0 %v58
    %502 = vmatmul.f32.gmra.mxu0 %v454
    %v503 = vpop.f32.mrf.mxu0
    %v504 = vadd.f32 %v463, %v503
    %505 = vdwg.mxu0
    %506 = vmatpush.msra.mxu0 %v119
    %507 = vmatpush.msra.mxu0 %v115
    %508 = vmatpush.msra.mxu0 %v111
    %509 = vmatpush.msra.mxu0 %v107
    %510 = vmatpush.msra.mxu0 %v103
    %511 = vmatpush.msra.mxu0 %v99
    %512 = vmatpush.msra.mxu0 %v95
    %513 = vmatpush.msra.mxu0 %v91
    %514 = vmatpush.msra.mxu0 %v87
    %515 = vmatpush.msra.mxu0 %v83
    %516 = vmatpush.msra.mxu0 %v79
    %517 = vmatpush.msra.mxu0 %v75
    %518 = vmatpush.msra.mxu0 %v71
    %519 = vmatpush.msra.mxu0 %v67
    %520 = vmatpush.msra.mxu0 %v63
    %521 = vmatpush.msra.mxu0 %v59
    %522 = vmatmul.f32.gmra.mxu0 %v454
    %v523 = vpop.f32.mrf.mxu0
    %v524 = vadd.f32 %v464, %v523
    %525 = vdwg.mxu0
    %526 = vmatpush.msra.mxu0 %v120
    %527 = vmatpush.msra.mxu0 %v116
    %528 = vmatpush.msra.mxu0 %v112
    %529 = vmatpush.msra.mxu0 %v108
    %530 = vmatpush.msra.mxu0 %v104
    %531 = vmatpush.msra.mxu0 %v100
    %532 = vmatpush.msra.mxu0 %v96
    %533 = vmatpush.msra.mxu0 %v92
    %534 = vmatpush.msra.mxu0 %v88
    %535 = vmatpush.msra.mxu0 %v84
    %536 = vmatpush.msra.mxu0 %v80
    %537 = vmatpush.msra.mxu0 %v76
    %538 = vmatpush.msra.mxu0 %v72
    %539 = vmatpush.msra.mxu0 %v68
    %540 = vmatpush.msra.mxu0 %v64
    %541 = vmatpush.msra.mxu0 %v60
    %542 = vmatmul.f32.gmra.mxu0 %v454
    %v543 = vpop.f32.mrf.mxu0
    %v544 = vadd.f32 %v465, %v543
    %545 = vdwg.mxu0
    %v546 = vadd.f32 %v484, %v222
    %v547 = vadd.f32 %v504, %v223
    %v548 = vadd.f32 %v524, %v224
    %v549 = vadd.f32 %v544, %v225
    %v550 = vxor.u32 %v546, 2147483648
    %v551 = vmul.f32 %v550, 1.442695
    %v552 = vpow.pop %v551
    %v553 = vadd.f32 %v552, 1.0
    %v554 = vrcp.pop %v553
    %v555 = vmul.f32 %v553, %v554
    %v556 = vsub.f32 1.0, %v555
    %v557 = vmul.f32 %v554, %v556
    %v558 = vadd.f32 %v554, %v557
    %vm559 = vweird.f32 %v553
    %vm560 = vweird.f32 %v554
    %vm561 = vmor %vm559, %vm560
    %v562 = vsel %vm561, %v554, %v558
    %v563 = vand.u32 2147483647, %v553
    %vm564 = vcmp.eq.f32.partialorder %v563, 8.507059e+37
    %v565 = vand.u32 %v553, 2147483648
    %v566 = vor.u32 1.1754944e-38, %v565
    %v567 = vsel %vm564, %v566, %v562
    %v568 = vmul.f32 1.0, %v567
    %v569 = vxor.u32 %v547, 2147483648
    %v570 = vmul.f32 %v569, 1.442695
    %v571 = vpow.pop %v570
    %v572 = vadd.f32 %v571, 1.0
    %v573 = vrcp.pop %v572
    %v574 = vmul.f32 %v572, %v573
    %v575 = vsub.f32 1.0, %v574
    %v576 = vmul.f32 %v573, %v575
    %v577 = vadd.f32 %v573, %v576
    %vm578 = vweird.f32 %v572
    %vm579 = vweird.f32 %v573
    %vm580 = vmor %vm578, %vm579
    %v581 = vsel %vm580, %v573, %v577
    %v582 = vand.u32 2147483647, %v572
    %vm583 = vcmp.eq.f32.partialorder %v582, 8.507059e+37
    %v584 = vand.u32 %v572, 2147483648
    %v585 = vor.u32 1.1754944e-38, %v584
    %v586 = vsel %vm583, %v585, %v581
    %v587 = vmul.f32 1.0, %v586
    %v588 = vtanh.pop %v548
    %v589 = vxor.u32 %v549, 2147483648
    %v590 = vmul.f32 %v589, 1.442695
    %v591 = vpow.pop %v590
    %v592 = vadd.f32 %v591, 1.0
    %v593 = vrcp.pop %v592
    %v594 = vmul.f32 %v592, %v593
    %v595 = vsub.f32 1.0, %v594
    %v596 = vmul.f32 %v593, %v595
    %v597 = vadd.f32 %v593, %v596
    %vm598 = vweird.f32 %v592
    %vm599 = vweird.f32 %v593
    %vm600 = vmor %vm598, %vm599
    %v601 = vsel %vm600, %v593, %v597
    %v602 = vand.u32 2147483647, %v592
    %vm603 = vcmp.eq.f32.partialorder %v602, 8.507059e+37
    %v604 = vand.u32 %v592, 2147483648
    %v605 = vor.u32 1.1754944e-38, %v604
    %v606 = vsel %vm603, %v605, %v601
    %v607 = vmul.f32 1.0, %v606
    %v608 = vmul.f32 %v587, %v452
    %v609 = vmul.f32 %v568, %v588
    %v610 = vadd.f32 %v608, %v609
    %v611 = vtanh.pop %v610
    %v612 = vmul.f32 %v607, %v611
    %s613 = scalar_lea.vmem %s0, 24
    %v614 = vld [vmem:[%s613] sm:$0xff]
    %616 = vset.pattern.permute.xlu0 0
    %617 = vperm.xlu0 %616, %v614
    %v618 = vpop.permute.xlu0 %617
    %v620 = vmul.f32 %v618, %v129
    %v621 = vmul.f32 %v618, %v130
    %v622 = vmul.f32 %v618, %v131
    %v623 = vmul.f32 %v618, %v132
    %624 = vmatpush.msra.mxu0 %v117
    %625 = vmatpush.msra.mxu0 %v113
    %626 = vmatpush.msra.mxu0 %v109
    %627 = vmatpush.msra.mxu0 %v105
    %628 = vmatpush.msra.mxu0 %v101
    %629 = vmatpush.msra.mxu0 %v97
    %630 = vmatpush.msra.mxu0 %v93
    %631 = vmatpush.msra.mxu0 %v89
    %632 = vmatpush.msra.mxu0 %v85
    %633 = vmatpush.msra.mxu0 %v81
    %634 = vmatpush.msra.mxu0 %v77
    %635 = vmatpush.msra.mxu0 %v73
    %636 = vmatpush.msra.mxu0 %v69
    %637 = vmatpush.msra.mxu0 %v65
    %638 = vmatpush.msra.mxu0 %v61
    %639 = vmatpush.msra.mxu0 %v57
    %640 = vmatmul.f32.gmra.mxu0 %v612
    %v641 = vpop.f32.mrf.mxu0
    %v642 = vadd.f32 %v620, %v641
    %643 = vdwg.mxu0
    %644 = vmatpush.msra.mxu0 %v118
    %645 = vmatpush.msra.mxu0 %v114
    %646 = vmatpush.msra.mxu0 %v110
    %647 = vmatpush.msra.mxu0 %v106
    %648 = vmatpush.msra.mxu0 %v102
    %649 = vmatpush.msra.mxu0 %v98
    %650 = vmatpush.msra.mxu0 %v94
    %651 = vmatpush.msra.mxu0 %v90
    %652 = vmatpush.msra.mxu0 %v86
    %653 = vmatpush.msra.mxu0 %v82
    %654 = vmatpush.msra.mxu0 %v78
    %655 = vmatpush.msra.mxu0 %v74
    %656 = vmatpush.msra.mxu0 %v70
    %657 = vmatpush.msra.mxu0 %v66
    %658 = vmatpush.msra.mxu0 %v62
    %659 = vmatpush.msra.mxu0 %v58
    %660 = vmatmul.f32.gmra.mxu0 %v612
    %v661 = vpop.f32.mrf.mxu0
    %v662 = vadd.f32 %v621, %v661
    %663 = vdwg.mxu0
    %664 = vmatpush.msra.mxu0 %v119
    %665 = vmatpush.msra.mxu0 %v115
    %666 = vmatpush.msra.mxu0 %v111
    %667 = vmatpush.msra.mxu0 %v107
    %668 = vmatpush.msra.mxu0 %v103
    %669 = vmatpush.msra.mxu0 %v99
    %670 = vmatpush.msra.mxu0 %v95
    %671 = vmatpush.msra.mxu0 %v91
    %672 = vmatpush.msra.mxu0 %v87
    %673 = vmatpush.msra.mxu0 %v83
    %674 = vmatpush.msra.mxu0 %v79
    %675 = vmatpush.msra.mxu0 %v75
    %676 = vmatpush.msra.mxu0 %v71
    %677 = vmatpush.msra.mxu0 %v67
    %678 = vmatpush.msra.mxu0 %v63
    %679 = vmatpush.msra.mxu0 %v59
    %680 = vmatmul.f32.gmra.mxu0 %v612
    %v681 = vpop.f32.mrf.mxu0
    %v682 = vadd.f32 %v622, %v681
    %683 = vdwg.mxu0
    %684 = vmatpush.msra.mxu0 %v120
    %685 = vmatpush.msra.mxu0 %v116
    %686 = vmatpush.msra.mxu0 %v112
    %687 = vmatpush.msra.mxu0 %v108
    %688 = vmatpush.msra.mxu0 %v104
    %689 = vmatpush.msra.mxu0 %v100
    %690 = vmatpush.msra.mxu0 %v96
    %691 = vmatpush.msra.mxu0 %v92
    %692 = vmatpush.msra.mxu0 %v88
    %693 = vmatpush.msra.mxu0 %v84
    %694 = vmatpush.msra.mxu0 %v80
    %695 = vmatpush.msra.mxu0 %v76
    %696 = vmatpush.msra.mxu0 %v72
    %697 = vmatpush.msra.mxu0 %v68
    %698 = vmatpush.msra.mxu0 %v64
    %699 = vmatpush.msra.mxu0 %v60
    %700 = vmatmul.f32.gmra.mxu0 %v612
    %v701 = vpop.f32.mrf.mxu0
    %v702 = vadd.f32 %v623, %v701
    %703 = vdwg.mxu0
    %v704 = vadd.f32 %v642, %v222
    %v705 = vadd.f32 %v662, %v223
    %v706 = vadd.f32 %v682, %v224
    %v707 = vadd.f32 %v702, %v225
    %v708 = vxor.u32 %v704, 2147483648
    %v709 = vmul.f32 %v708, 1.442695
    %v710 = vpow.pop %v709
    %v711 = vadd.f32 %v710, 1.0
    %v712 = vrcp.pop %v711
    %v713 = vmul.f32 %v711, %v712
    %v714 = vsub.f32 1.0, %v713
    %v715 = vmul.f32 %v712, %v714
    %v716 = vadd.f32 %v712, %v715
    %vm717 = vweird.f32 %v711
    %vm718 = vweird.f32 %v712
    %vm719 = vmor %vm717, %vm718
    %v720 = vsel %vm719, %v712, %v716
    %v721 = vand.u32 2147483647, %v711
    %vm722 = vcmp.eq.f32.partialorder %v721, 8.507059e+37
    %v723 = vand.u32 %v711, 2147483648
    %v724 = vor.u32 1.1754944e-38, %v723
    %v725 = vsel %vm722, %v724, %v720
    %v726 = vmul.f32 1.0, %v725
    %v727 = vxor.u32 %v705, 2147483648
    %v728 = vmul.f32 %v727, 1.442695
    %v729 = vpow.pop %v728
    %v730 = vadd.f32 %v729, 1.0
    %v731 = vrcp.pop %v730
    %v732 = vmul.f32 %v730, %v731
    %v733 = vsub.f32 1.0, %v732
    %v734 = vmul.f32 %v731, %v733
    %v735 = vadd.f32 %v731, %v734
    %vm736 = vweird.f32 %v730
    %vm737 = vweird.f32 %v731
    %vm738 = vmor %vm736, %vm737
    %v739 = vsel %vm738, %v731, %v735
    %v740 = vand.u32 2147483647, %v730
    %vm741 = vcmp.eq.f32.partialorder %v740, 8.507059e+37
    %v742 = vand.u32 %v730, 2147483648
    %v743 = vor.u32 1.1754944e-38, %v742
    %v744 = vsel %vm741, %v743, %v739
    %v745 = vmul.f32 1.0, %v744
    %v746 = vtanh.pop %v706
    %v747 = vxor.u32 %v707, 2147483648
    %v748 = vmul.f32 %v747, 1.442695
    %v749 = vpow.pop %v748
    %v750 = vadd.f32 %v749, 1.0
    %v751 = vrcp.pop %v750
    %v752 = vmul.f32 %v750, %v751
    %v753 = vsub.f32 1.0, %v752
    %v754 = vmul.f32 %v751, %v753
    %v755 = vadd.f32 %v751, %v754
    %vm756 = vweird.f32 %v750
    %vm757 = vweird.f32 %v751
    %vm758 = vmor %vm756, %vm757
    %v759 = vsel %vm758, %v751, %v755
    %v760 = vand.u32 2147483647, %v750
    %vm761 = vcmp.eq.f32.partialorder %v760, 8.507059e+37
    %v762 = vand.u32 %v750, 2147483648
    %v763 = vor.u32 1.1754944e-38, %v762
    %v764 = vsel %vm761, %v763, %v759
    %v765 = vmul.f32 1.0, %v764
    %v766 = vmul.f32 %v745, %v610
    %v767 = vmul.f32 %v726, %v746
    %v768 = vadd.f32 %v766, %v767
    %v769 = vtanh.pop %v768
    %v770 = vmul.f32 %v765, %v769
    %s771 = scalar_lea.vmem %s0, 32
    %v772 = vld [vmem:[%s771] sm:$0xff]
    %774 = vset.pattern.permute.xlu0 0
    %775 = vperm.xlu0 %774, %v772
    %v776 = vpop.permute.xlu0 %775
    %v778 = vmul.f32 %v776, %v129
    %v779 = vmul.f32 %v776, %v130
    %v780 = vmul.f32 %v776, %v131
    %v781 = vmul.f32 %v776, %v132
    %782 = vmatpush.msra.mxu0 %v117
    %783 = vmatpush.msra.mxu0 %v113
    %784 = vmatpush.msra.mxu0 %v109
    %785 = vmatpush.msra.mxu0 %v105
    %786 = vmatpush.msra.mxu0 %v101
    %787 = vmatpush.msra.mxu0 %v97
    %788 = vmatpush.msra.mxu0 %v93
    %789 = vmatpush.msra.mxu0 %v89
    %790 = vmatpush.msra.mxu0 %v85
    %791 = vmatpush.msra.mxu0 %v81
    %792 = vmatpush.msra.mxu0 %v77
    %793 = vmatpush.msra.mxu0 %v73
    %794 = vmatpush.msra.mxu0 %v69
    %795 = vmatpush.msra.mxu0 %v65
    %796 = vmatpush.msra.mxu0 %v61
    %797 = vmatpush.msra.mxu0 %v57
    %798 = vmatmul.f32.gmra.mxu0 %v770
    %v799 = vpop.f32.mrf.mxu0
    %v800 = vadd.f32 %v778, %v799
    %801 = vdwg.mxu0
    %802 = vmatpush.msra.mxu0 %v118
    %803 = vmatpush.msra.mxu0 %v114
    %804 = vmatpush.msra.mxu0 %v110
    %805 = vmatpush.msra.mxu0 %v106
    %806 = vmatpush.msra.mxu0 %v102
    %807 = vmatpush.msra.mxu0 %v98
    %808 = vmatpush.msra.mxu0 %v94
    %809 = vmatpush.msra.mxu0 %v90
    %810 = vmatpush.msra.mxu0 %v86
    %811 = vmatpush.msra.mxu0 %v82
    %812 = vmatpush.msra.mxu0 %v78
    %813 = vmatpush.msra.mxu0 %v74
    %814 = vmatpush.msra.mxu0 %v70
    %815 = vmatpush.msra.mxu0 %v66
    %816 = vmatpush.msra.mxu0 %v62
    %817 = vmatpush.msra.mxu0 %v58
    %818 = vmatmul.f32.gmra.mxu0 %v770
    %v819 = vpop.f32.mrf.mxu0
    %v820 = vadd.f32 %v779, %v819
    %821 = vdwg.mxu0
    %822 = vmatpush.msra.mxu0 %v119
    %823 = vmatpush.msra.mxu0 %v115
    %824 = vmatpush.msra.mxu0 %v111
    %825 = vmatpush.msra.mxu0 %v107
    %826 = vmatpush.msra.mxu0 %v103
    %827 = vmatpush.msra.mxu0 %v99
    %828 = vmatpush.msra.mxu0 %v95
    %829 = vmatpush.msra.mxu0 %v91
    %830 = vmatpush.msra.mxu0 %v87
    %831 = vmatpush.msra.mxu0 %v83
    %832 = vmatpush.msra.mxu0 %v79
    %833 = vmatpush.msra.mxu0 %v75
    %834 = vmatpush.msra.mxu0 %v71
    %835 = vmatpush.msra.mxu0 %v67
    %836 = vmatpush.msra.mxu0 %v63
    %837 = vmatpush.msra.mxu0 %v59
    %838 = vmatmul.f32.gmra.mxu0 %v770
    %v839 = vpop.f32.mrf.mxu0
    %v840 = vadd.f32 %v780, %v839
    %841 = vdwg.mxu0
    %842 = vmatpush.msra.mxu0 %v120
    %843 = vmatpush.msra.mxu0 %v116
    %844 = vmatpush.msra.mxu0 %v112
    %845 = vmatpush.msra.mxu0 %v108
    %846 = vmatpush.msra.mxu0 %v104
    %847 = vmatpush.msra.mxu0 %v100
    %848 = vmatpush.msra.mxu0 %v96
    %849 = vmatpush.msra.mxu0 %v92
    %850 = vmatpush.msra.mxu0 %v88
    %851 = vmatpush.msra.mxu0 %v84
    %852 = vmatpush.msra.mxu0 %v80
    %853 = vmatpush.msra.mxu0 %v76
    %854 = vmatpush.msra.mxu0 %v72
    %855 = vmatpush.msra.mxu0 %v68
    %856 = vmatpush.msra.mxu0 %v64
    %857 = vmatpush.msra.mxu0 %v60
    %858 = vmatmul.f32.gmra.mxu0 %v770
    %v859 = vpop.f32.mrf.mxu0
    %v860 = vadd.f32 %v781, %v859
    %861 = vdwg.mxu0
    %v862 = vadd.f32 %v800, %v222
    %v863 = vadd.f32 %v820, %v223
    %v864 = vadd.f32 %v840, %v224
    %v865 = vadd.f32 %v860, %v225
    %v866 = vxor.u32 %v862, 2147483648
    %v867 = vmul.f32 %v866, 1.442695
    %v868 = vpow.pop %v867
    %v869 = vadd.f32 %v868, 1.0
    %v870 = vrcp.pop %v869
    %v871 = vmul.f32 %v869, %v870
    %v872 = vsub.f32 1.0, %v871
    %v873 = vmul.f32 %v870, %v872
    %v874 = vadd.f32 %v870, %v873
    %vm875 = vweird.f32 %v869
    %vm876 = vweird.f32 %v870
    %vm877 = vmor %vm875, %vm876
    %v878 = vsel %vm877, %v870, %v874
    %v879 = vand.u32 2147483647, %v869
    %vm880 = vcmp.eq.f32.partialorder %v879, 8.507059e+37
    %v881 = vand.u32 %v869, 2147483648
    %v882 = vor.u32 1.1754944e-38, %v881
    %v883 = vsel %vm880, %v882, %v878
    %v884 = vmul.f32 1.0, %v883
    %v885 = vxor.u32 %v863, 2147483648
    %v886 = vmul.f32 %v885, 1.442695
    %v887 = vpow.pop %v886
    %v888 = vadd.f32 %v887, 1.0
    %v889 = vrcp.pop %v888
    %v890 = vmul.f32 %v888, %v889
    %v891 = vsub.f32 1.0, %v890
    %v892 = vmul.f32 %v889, %v891
    %v893 = vadd.f32 %v889, %v892
    %vm894 = vweird.f32 %v888
    %vm895 = vweird.f32 %v889
    %vm896 = vmor %vm894, %vm895
    %v897 = vsel %vm896, %v889, %v893
    %v898 = vand.u32 2147483647, %v888
    %vm899 = vcmp.eq.f32.partialorder %v898, 8.507059e+37
    %v900 = vand.u32 %v888, 2147483648
    %v901 = vor.u32 1.1754944e-38, %v900
    %v902 = vsel %vm899, %v901, %v897
    %v903 = vmul.f32 1.0, %v902
    %v904 = vtanh.pop %v864
    %v905 = vxor.u32 %v865, 2147483648
    %v906 = vmul.f32 %v905, 1.442695
    %v907 = vpow.pop %v906
    %v908 = vadd.f32 %v907, 1.0
    %v909 = vrcp.pop %v908
    %v910 = vmul.f32 %v908, %v909
    %v911 = vsub.f32 1.0, %v910
    %v912 = vmul.f32 %v909, %v911
    %v913 = vadd.f32 %v909, %v912
    %vm914 = vweird.f32 %v908
    %vm915 = vweird.f32 %v909
    %vm916 = vmor %vm914, %vm915
    %v917 = vsel %vm916, %v909, %v913
    %v918 = vand.u32 2147483647, %v908
    %vm919 = vcmp.eq.f32.partialorder %v918, 8.507059e+37
    %v920 = vand.u32 %v908, 2147483648
    %v921 = vor.u32 1.1754944e-38, %v920
    %v922 = vsel %vm919, %v921, %v917
    %v923 = vmul.f32 1.0, %v922
    %v924 = vmul.f32 %v903, %v768
    %v925 = vmul.f32 %v884, %v904
    %v926 = vadd.f32 %v924, %v925
    %v927 = vtanh.pop %v926
    %v928 = vmul.f32 %v923, %v927
    %s929 = scalar_lea.vmem %s0, 40
    %v930 = vld [vmem:[%s929] sm:$0xff]
    %932 = vset.pattern.permute.xlu0 0
    %933 = vperm.xlu0 %932, %v930
    %v934 = vpop.permute.xlu0 %933
    %v936 = vmul.f32 %v934, %v129
    %v937 = vmul.f32 %v934, %v130
    %v938 = vmul.f32 %v934, %v131
    %v939 = vmul.f32 %v934, %v132
    %940 = vmatpush.msra.mxu0 %v117
    %941 = vmatpush.msra.mxu0 %v113
    %942 = vmatpush.msra.mxu0 %v109
    %943 = vmatpush.msra.mxu0 %v105
    %944 = vmatpush.msra.mxu0 %v101
    %945 = vmatpush.msra.mxu0 %v97
    %946 = vmatpush.msra.mxu0 %v93
    %947 = vmatpush.msra.mxu0 %v89
    %948 = vmatpush.msra.mxu0 %v85
    %949 = vmatpush.msra.mxu0 %v81
    %950 = vmatpush.msra.mxu0 %v77
    %951 = vmatpush.msra.mxu0 %v73
    %952 = vmatpush.msra.mxu0 %v69
    %953 = vmatpush.msra.mxu0 %v65
    %954 = vmatpush.msra.mxu0 %v61
    %955 = vmatpush.msra.mxu0 %v57
    %956 = vmatmul.f32.gmra.mxu0 %v928
    %v957 = vpop.f32.mrf.mxu0
    %v958 = vadd.f32 %v936, %v957
    %959 = vdwg.mxu0
    %960 = vmatpush.msra.mxu0 %v118
    %961 = vmatpush.msra.mxu0 %v114
    %962 = vmatpush.msra.mxu0 %v110
    %963 = vmatpush.msra.mxu0 %v106
    %964 = vmatpush.msra.mxu0 %v102
    %965 = vmatpush.msra.mxu0 %v98
    %966 = vmatpush.msra.mxu0 %v94
    %967 = vmatpush.msra.mxu0 %v90
    %968 = vmatpush.msra.mxu0 %v86
    %969 = vmatpush.msra.mxu0 %v82
    %970 = vmatpush.msra.mxu0 %v78
    %971 = vmatpush.msra.mxu0 %v74
    %972 = vmatpush.msra.mxu0 %v70
    %973 = vmatpush.msra.mxu0 %v66
    %974 = vmatpush.msra.mxu0 %v62
    %975 = vmatpush.msra.mxu0 %v58
    %976 = vmatmul.f32.gmra.mxu0 %v928
    %v977 = vpop.f32.mrf.mxu0
    %v978 = vadd.f32 %v937, %v977
    %979 = vdwg.mxu0
    %980 = vmatpush.msra.mxu0 %v119
    %981 = vmatpush.msra.mxu0 %v115
    %982 = vmatpush.msra.mxu0 %v111
    %983 = vmatpush.msra.mxu0 %v107
    %984 = vmatpush.msra.mxu0 %v103
    %985 = vmatpush.msra.mxu0 %v99
    %986 = vmatpush.msra.mxu0 %v95
    %987 = vmatpush.msra.mxu0 %v91
    %988 = vmatpush.msra.mxu0 %v87
    %989 = vmatpush.msra.mxu0 %v83
    %990 = vmatpush.msra.mxu0 %v79
    %991 = vmatpush.msra.mxu0 %v75
    %992 = vmatpush.msra.mxu0 %v71
    %993 = vmatpush.msra.mxu0 %v67
    %994 = vmatpush.msra.mxu0 %v63
    %995 = vmatpush.msra.mxu0 %v59
    %996 = vmatmul.f32.gmra.mxu0 %v928
    %v997 = vpop.f32.mrf.mxu0
    %v998 = vadd.f32 %v938, %v997
    %999 = vdwg.mxu0
    %1000 = vmatpush.msra.mxu0 %v120
    %1001 = vmatpush.msra.mxu0 %v116
    %1002 = vmatpush.msra.mxu0 %v112
    %1003 = vmatpush.msra.mxu0 %v108
    %1004 = vmatpush.msra.mxu0 %v104
    %1005 = vmatpush.msra.mxu0 %v100
    %1006 = vmatpush.msra.mxu0 %v96
    %1007 = vmatpush.msra.mxu0 %v92
    %1008 = vmatpush.msra.mxu0 %v88
    %1009 = vmatpush.msra.mxu0 %v84
    %1010 = vmatpush.msra.mxu0 %v80
    %1011 = vmatpush.msra.mxu0 %v76
    %1012 = vmatpush.msra.mxu0 %v72
    %1013 = vmatpush.msra.mxu0 %v68
    %1014 = vmatpush.msra.mxu0 %v64
    %1015 = vmatpush.msra.mxu0 %v60
    %1016 = vmatmul.f32.gmra.mxu0 %v928
    %v1017 = vpop.f32.mrf.mxu0
    %v1018 = vadd.f32 %v939, %v1017
    %1019 = vdwg.mxu0
    %v1020 = vadd.f32 %v958, %v222
    %v1021 = vadd.f32 %v978, %v223
    %v1022 = vadd.f32 %v998, %v224
    %v1023 = vadd.f32 %v1018, %v225
    %v1024 = vxor.u32 %v1020, 2147483648
    %v1025 = vmul.f32 %v1024, 1.442695
    %v1026 = vpow.pop %v1025
    %v1027 = vadd.f32 %v1026, 1.0
    %v1028 = vrcp.pop %v1027
    %v1029 = vmul.f32 %v1027, %v1028
    %v1030 = vsub.f32 1.0, %v1029
    %v1031 = vmul.f32 %v1028, %v1030
    %v1032 = vadd.f32 %v1028, %v1031
    %vm1033 = vweird.f32 %v1027
    %vm1034 = vweird.f32 %v1028
    %vm1035 = vmor %vm1033, %vm1034
    %v1036 = vsel %vm1035, %v1028, %v1032
    %v1037 = vand.u32 2147483647, %v1027
    %vm1038 = vcmp.eq.f32.partialorder %v1037, 8.507059e+37
    %v1039 = vand.u32 %v1027, 2147483648
    %v1040 = vor.u32 1.1754944e-38, %v1039
    %v1041 = vsel %vm1038, %v1040, %v1036
    %v1042 = vmul.f32 1.0, %v1041
    %v1043 = vxor.u32 %v1021, 2147483648
    %v1044 = vmul.f32 %v1043, 1.442695
    %v1045 = vpow.pop %v1044
    %v1046 = vadd.f32 %v1045, 1.0
    %v1047 = vrcp.pop %v1046
    %v1048 = vmul.f32 %v1046, %v1047
    %v1049 = vsub.f32 1.0, %v1048
    %v1050 = vmul.f32 %v1047, %v1049
    %v1051 = vadd.f32 %v1047, %v1050
    %vm1052 = vweird.f32 %v1046
    %vm1053 = vweird.f32 %v1047
    %vm1054 = vmor %vm1052, %vm1053
    %v1055 = vsel %vm1054, %v1047, %v1051
    %v1056 = vand.u32 2147483647, %v1046
    %vm1057 = vcmp.eq.f32.partialorder %v1056, 8.507059e+37
    %v1058 = vand.u32 %v1046, 2147483648
    %v1059 = vor.u32 1.1754944e-38, %v1058
    %v1060 = vsel %vm1057, %v1059, %v1055
    %v1061 = vmul.f32 1.0, %v1060
    %v1062 = vtanh.pop %v1022
    %v1063 = vxor.u32 %v1023, 2147483648
    %v1064 = vmul.f32 %v1063, 1.442695
    %v1065 = vpow.pop %v1064
    %v1066 = vadd.f32 %v1065, 1.0
    %v1067 = vrcp.pop %v1066
    %v1068 = vmul.f32 %v1066, %v1067
    %v1069 = vsub.f32 1.0, %v1068
    %v1070 = vmul.f32 %v1067, %v1069
    %v1071 = vadd.f32 %v1067, %v1070
    %vm1072 = vweird.f32 %v1066
    %vm1073 = vweird.f32 %v1067
    %vm1074 = vmor %vm1072, %vm1073
    %v1075 = vsel %vm1074, %v1067, %v1071
    %v1076 = vand.u32 2147483647, %v1066
    %vm1077 = vcmp.eq.f32.partialorder %v1076, 8.507059e+37
    %v1078 = vand.u32 %v1066, 2147483648
    %v1079 = vor.u32 1.1754944e-38, %v1078
    %v1080 = vsel %vm1077, %v1079, %v1075
    %v1081 = vmul.f32 1.0, %v1080
    %v1082 = vmul.f32 %v1061, %v926
    %v1083 = vmul.f32 %v1042, %v1062
    %v1084 = vadd.f32 %v1082, %v1083
    %v1085 = vtanh.pop %v1084
    %v1086 = vmul.f32 %v1081, %v1085
    %s1087 = scalar_lea.vmem %s0, 48
    %v1088 = vld [vmem:[%s1087] sm:$0xff]
    %1090 = vset.pattern.permute.xlu0 0
    %1091 = vperm.xlu0 %1090, %v1088
    %v1092 = vpop.permute.xlu0 %1091
    %v1094 = vmul.f32 %v1092, %v129
    %v1095 = vmul.f32 %v1092, %v130
    %v1096 = vmul.f32 %v1092, %v131
    %v1097 = vmul.f32 %v1092, %v132
    %1098 = vmatpush.msra.mxu0 %v117
    %1099 = vmatpush.msra.mxu0 %v113
    %1100 = vmatpush.msra.mxu0 %v109
    %1101 = vmatpush.msra.mxu0 %v105
    %1102 = vmatpush.msra.mxu0 %v101
    %1103 = vmatpush.msra.mxu0 %v97
    %1104 = vmatpush.msra.mxu0 %v93
    %1105 = vmatpush.msra.mxu0 %v89
    %1106 = vmatpush.msra.mxu0 %v85
    %1107 = vmatpush.msra.mxu0 %v81
    %1108 = vmatpush.msra.mxu0 %v77
    %1109 = vmatpush.msra.mxu0 %v73
    %1110 = vmatpush.msra.mxu0 %v69
    %1111 = vmatpush.msra.mxu0 %v65
    %1112 = vmatpush.msra.mxu0 %v61
    %1113 = vmatpush.msra.mxu0 %v57
    %1114 = vmatmul.f32.gmra.mxu0 %v1086
    %v1115 = vpop.f32.mrf.mxu0
    %v1116 = vadd.f32 %v1094, %v1115
    %1117 = vdwg.mxu0
    %1118 = vmatpush.msra.mxu0 %v118
    %1119 = vmatpush.msra.mxu0 %v114
    %1120 = vmatpush.msra.mxu0 %v110
    %1121 = vmatpush.msra.mxu0 %v106
    %1122 = vmatpush.msra.mxu0 %v102
    %1123 = vmatpush.msra.mxu0 %v98
    %1124 = vmatpush.msra.mxu0 %v94
    %1125 = vmatpush.msra.mxu0 %v90
    %1126 = vmatpush.msra.mxu0 %v86
    %1127 = vmatpush.msra.mxu0 %v82
    %1128 = vmatpush.msra.mxu0 %v78
    %1129 = vmatpush.msra.mxu0 %v74
    %1130 = vmatpush.msra.mxu0 %v70
    %1131 = vmatpush.msra.mxu0 %v66
    %1132 = vmatpush.msra.mxu0 %v62
    %1133 = vmatpush.msra.mxu0 %v58
    %1134 = vmatmul.f32.gmra.mxu0 %v1086
    %v1135 = vpop.f32.mrf.mxu0
    %v1136 = vadd.f32 %v1095, %v1135
    %1137 = vdwg.mxu0
    %1138 = vmatpush.msra.mxu0 %v119
    %1139 = vmatpush.msra.mxu0 %v115
    %1140 = vmatpush.msra.mxu0 %v111
    %1141 = vmatpush.msra.mxu0 %v107
    %1142 = vmatpush.msra.mxu0 %v103
    %1143 = vmatpush.msra.mxu0 %v99
    %1144 = vmatpush.msra.mxu0 %v95
    %1145 = vmatpush.msra.mxu0 %v91
    %1146 = vmatpush.msra.mxu0 %v87
    %1147 = vmatpush.msra.mxu0 %v83
    %1148 = vmatpush.msra.mxu0 %v79
    %1149 = vmatpush.msra.mxu0 %v75
    %1150 = vmatpush.msra.mxu0 %v71
    %1151 = vmatpush.msra.mxu0 %v67
    %1152 = vmatpush.msra.mxu0 %v63
    %1153 = vmatpush.msra.mxu0 %v59
    %1154 = vmatmul.f32.gmra.mxu0 %v1086
    %v1155 = vpop.f32.mrf.mxu0
    %v1156 = vadd.f32 %v1096, %v1155
    %1157 = vdwg.mxu0
    %1158 = vmatpush.msra.mxu0 %v120
    %1159 = vmatpush.msra.mxu0 %v116
    %1160 = vmatpush.msra.mxu0 %v112
    %1161 = vmatpush.msra.mxu0 %v108
    %1162 = vmatpush.msra.mxu0 %v104
    %1163 = vmatpush.msra.mxu0 %v100
    %1164 = vmatpush.msra.mxu0 %v96
    %1165 = vmatpush.msra.mxu0 %v92
    %1166 = vmatpush.msra.mxu0 %v88
    %1167 = vmatpush.msra.mxu0 %v84
    %1168 = vmatpush.msra.mxu0 %v80
    %1169 = vmatpush.msra.mxu0 %v76
    %1170 = vmatpush.msra.mxu0 %v72
    %1171 = vmatpush.msra.mxu0 %v68
    %1172 = vmatpush.msra.mxu0 %v64
    %1173 = vmatpush.msra.mxu0 %v60
    %1174 = vmatmul.f32.gmra.mxu0 %v1086
    %v1175 = vpop.f32.mrf.mxu0
    %v1176 = vadd.f32 %v1097, %v1175
    %1177 = vdwg.mxu0
    %v1178 = vadd.f32 %v1116, %v222
    %v1179 = vadd.f32 %v1136, %v223
    %v1180 = vadd.f32 %v1156, %v224
    %v1181 = vadd.f32 %v1176, %v225
    %v1182 = vxor.u32 %v1178, 2147483648
    %v1183 = vmul.f32 %v1182, 1.442695
    %v1184 = vpow.pop %v1183
    %v1185 = vadd.f32 %v1184, 1.0
    %v1186 = vrcp.pop %v1185
    %v1187 = vmul.f32 %v1185, %v1186
    %v1188 = vsub.f32 1.0, %v1187
    %v1189 = vmul.f32 %v1186, %v1188
    %v1190 = vadd.f32 %v1186, %v1189
    %vm1191 = vweird.f32 %v1185
    %vm1192 = vweird.f32 %v1186
    %vm1193 = vmor %vm1191, %vm1192
    %v1194 = vsel %vm1193, %v1186, %v1190
    %v1195 = vand.u32 2147483647, %v1185
    %vm1196 = vcmp.eq.f32.partialorder %v1195, 8.507059e+37
    %v1197 = vand.u32 %v1185, 2147483648
    %v1198 = vor.u32 1.1754944e-38, %v1197
    %v1199 = vsel %vm1196, %v1198, %v1194
    %v1200 = vmul.f32 1.0, %v1199
    %v1201 = vxor.u32 %v1179, 2147483648
    %v1202 = vmul.f32 %v1201, 1.442695
    %v1203 = vpow.pop %v1202
    %v1204 = vadd.f32 %v1203, 1.0
    %v1205 = vrcp.pop %v1204
    %v1206 = vmul.f32 %v1204, %v1205
    %v1207 = vsub.f32 1.0, %v1206
    %v1208 = vmul.f32 %v1205, %v1207
    %v1209 = vadd.f32 %v1205, %v1208
    %vm1210 = vweird.f32 %v1204
    %vm1211 = vweird.f32 %v1205
    %vm1212 = vmor %vm1210, %vm1211
    %v1213 = vsel %vm1212, %v1205, %v1209
    %v1214 = vand.u32 2147483647, %v1204
    %vm1215 = vcmp.eq.f32.partialorder %v1214, 8.507059e+37
    %v1216 = vand.u32 %v1204, 2147483648
    %v1217 = vor.u32 1.1754944e-38, %v1216
    %v1218 = vsel %vm1215, %v1217, %v1213
    %v1219 = vmul.f32 1.0, %v1218
    %v1220 = vtanh.pop %v1180
    %v1221 = vxor.u32 %v1181, 2147483648
    %v1222 = vmul.f32 %v1221, 1.442695
    %v1223 = vpow.pop %v1222
    %v1224 = vadd.f32 %v1223, 1.0
    %v1225 = vrcp.pop %v1224
    %v1226 = vmul.f32 %v1224, %v1225
    %v1227 = vsub.f32 1.0, %v1226
    %v1228 = vmul.f32 %v1225, %v1227
    %v1229 = vadd.f32 %v1225, %v1228
    %vm1230 = vweird.f32 %v1224
    %vm1231 = vweird.f32 %v1225
    %vm1232 = vmor %vm1230, %vm1231
    %v1233 = vsel %vm1232, %v1225, %v1229
    %v1234 = vand.u32 2147483647, %v1224
    %vm1235 = vcmp.eq.f32.partialorder %v1234, 8.507059e+37
    %v1236 = vand.u32 %v1224, 2147483648
    %v1237 = vor.u32 1.1754944e-38, %v1236
    %v1238 = vsel %vm1235, %v1237, %v1233
    %v1239 = vmul.f32 1.0, %v1238
    %v1240 = vmul.f32 %v1219, %v1084
    %v1241 = vmul.f32 %v1200, %v1220
    %v1242 = vadd.f32 %v1240, %v1241
    %v1243 = vtanh.pop %v1242
    %v1244 = vmul.f32 %v1239, %v1243
    %s1245 = scalar_lea.vmem %s0, 56
    %v1246 = vld [vmem:[%s1245] sm:$0xff]
    %1248 = vset.pattern.permute.xlu0 0
    %1249 = vperm.xlu0 %1248, %v1246
    %v1250 = vpop.permute.xlu0 %1249
    %v1252 = vmul.f32 %v1250, %v129
    %v1253 = vmul.f32 %v1250, %v130
    %v1254 = vmul.f32 %v1250, %v131
    %v1255 = vmul.f32 %v1250, %v132
    %1256 = vmatpush.msra.mxu0 %v117
    %1257 = vmatpush.msra.mxu0 %v113
    %1258 = vmatpush.msra.mxu0 %v109
    %1259 = vmatpush.msra.mxu0 %v105
    %1260 = vmatpush.msra.mxu0 %v101
    %1261 = vmatpush.msra.mxu0 %v97
    %1262 = vmatpush.msra.mxu0 %v93
    %1263 = vmatpush.msra.mxu0 %v89
    %1264 = vmatpush.msra.mxu0 %v85
    %1265 = vmatpush.msra.mxu0 %v81
    %1266 = vmatpush.msra.mxu0 %v77
    %1267 = vmatpush.msra.mxu0 %v73
    %1268 = vmatpush.msra.mxu0 %v69
    %1269 = vmatpush.msra.mxu0 %v65
    %1270 = vmatpush.msra.mxu0 %v61
    %1271 = vmatpush.msra.mxu0 %v57
    %1272 = vmatmul.f32.gmra.mxu0 %v1244
    %v1273 = vpop.f32.mrf.mxu0
    %v1274 = vadd.f32 %v1252, %v1273
    %1275 = vdwg.mxu0
    %1276 = vmatpush.msra.mxu0 %v118
    %1277 = vmatpush.msra.mxu0 %v114
    %1278 = vmatpush.msra.mxu0 %v110
    %1279 = vmatpush.msra.mxu0 %v106
    %1280 = vmatpush.msra.mxu0 %v102
    %1281 = vmatpush.msra.mxu0 %v98
    %1282 = vmatpush.msra.mxu0 %v94
    %1283 = vmatpush.msra.mxu0 %v90
    %1284 = vmatpush.msra.mxu0 %v86
    %1285 = vmatpush.msra.mxu0 %v82
    %1286 = vmatpush.msra.mxu0 %v78
    %1287 = vmatpush.msra.mxu0 %v74
    %1288 = vmatpush.msra.mxu0 %v70
    %1289 = vmatpush.msra.mxu0 %v66
    %1290 = vmatpush.msra.mxu0 %v62
    %1291 = vmatpush.msra.mxu0 %v58
    %1292 = vmatmul.f32.gmra.mxu0 %v1244
    %v1293 = vpop.f32.mrf.mxu0
    %v1294 = vadd.f32 %v1253, %v1293
    %1295 = vdwg.mxu0
    %1296 = vmatpush.msra.mxu0 %v119
    %1297 = vmatpush.msra.mxu0 %v115
    %1298 = vmatpush.msra.mxu0 %v111
    %1299 = vmatpush.msra.mxu0 %v107
    %1300 = vmatpush.msra.mxu0 %v103
    %1301 = vmatpush.msra.mxu0 %v99
    %1302 = vmatpush.msra.mxu0 %v95
    %1303 = vmatpush.msra.mxu0 %v91
    %1304 = vmatpush.msra.mxu0 %v87
    %1305 = vmatpush.msra.mxu0 %v83
    %1306 = vmatpush.msra.mxu0 %v79
    %1307 = vmatpush.msra.mxu0 %v75
    %1308 = vmatpush.msra.mxu0 %v71
    %1309 = vmatpush.msra.mxu0 %v67
    %1310 = vmatpush.msra.mxu0 %v63
    %1311 = vmatpush.msra.mxu0 %v59
    %1312 = vmatmul.f32.gmra.mxu0 %v1244
    %v1313 = vpop.f32.mrf.mxu0
    %v1314 = vadd.f32 %v1254, %v1313
    %1315 = vdwg.mxu0
    %1316 = vmatpush.msra.mxu0 %v120
    %1317 = vmatpush.msra.mxu0 %v116
    %1318 = vmatpush.msra.mxu0 %v112
    %1319 = vmatpush.msra.mxu0 %v108
    %1320 = vmatpush.msra.mxu0 %v104
    %1321 = vmatpush.msra.mxu0 %v100
    %1322 = vmatpush.msra.mxu0 %v96
    %1323 = vmatpush.msra.mxu0 %v92
    %1324 = vmatpush.msra.mxu0 %v88
    %1325 = vmatpush.msra.mxu0 %v84
    %1326 = vmatpush.msra.mxu0 %v80
    %1327 = vmatpush.msra.mxu0 %v76
    %1328 = vmatpush.msra.mxu0 %v72
    %1329 = vmatpush.msra.mxu0 %v68
    %1330 = vmatpush.msra.mxu0 %v64
    %1331 = vmatpush.msra.mxu0 %v60
    %1332 = vmatmul.f32.gmra.mxu0 %v1244
    %v1333 = vpop.f32.mrf.mxu0
    %v1334 = vadd.f32 %v1255, %v1333
    %1335 = vdwg.mxu0
    %v1336 = vadd.f32 %v1274, %v222
    %v1337 = vadd.f32 %v1294, %v223
    %v1338 = vadd.f32 %v1314, %v224
    %v1339 = vadd.f32 %v1334, %v225
    %v1340 = vxor.u32 %v1336, 2147483648
    %v1341 = vmul.f32 %v1340, 1.442695
    %v1342 = vpow.pop %v1341
    %v1343 = vadd.f32 %v1342, 1.0
    %v1344 = vrcp.pop %v1343
    %v1345 = vmul.f32 %v1343, %v1344
    %v1346 = vsub.f32 1.0, %v1345
    %v1347 = vmul.f32 %v1344, %v1346
    %v1348 = vadd.f32 %v1344, %v1347
    %vm1349 = vweird.f32 %v1343
    %vm1350 = vweird.f32 %v1344
    %vm1351 = vmor %vm1349, %vm1350
    %v1352 = vsel %vm1351, %v1344, %v1348
    %v1353 = vand.u32 2147483647, %v1343
    %vm1354 = vcmp.eq.f32.partialorder %v1353, 8.507059e+37
    %v1355 = vand.u32 %v1343, 2147483648
    %v1356 = vor.u32 1.1754944e-38, %v1355
    %v1357 = vsel %vm1354, %v1356, %v1352
    %v1358 = vmul.f32 1.0, %v1357
    %v1359 = vxor.u32 %v1337, 2147483648
    %v1360 = vmul.f32 %v1359, 1.442695
    %v1361 = vpow.pop %v1360
    %v1362 = vadd.f32 %v1361, 1.0
    %v1363 = vrcp.pop %v1362
    %v1364 = vmul.f32 %v1362, %v1363
    %v1365 = vsub.f32 1.0, %v1364
    %v1366 = vmul.f32 %v1363, %v1365
    %v1367 = vadd.f32 %v1363, %v1366
    %vm1368 = vweird.f32 %v1362
    %vm1369 = vweird.f32 %v1363
    %vm1370 = vmor %vm1368, %vm1369
    %v1371 = vsel %vm1370, %v1363, %v1367
    %v1372 = vand.u32 2147483647, %v1362
    %vm1373 = vcmp.eq.f32.partialorder %v1372, 8.507059e+37
    %v1374 = vand.u32 %v1362, 2147483648
    %v1375 = vor.u32 1.1754944e-38, %v1374
    %v1376 = vsel %vm1373, %v1375, %v1371
    %v1377 = vmul.f32 1.0, %v1376
    %v1378 = vtanh.pop %v1338
    %v1379 = vxor.u32 %v1339, 2147483648
    %v1380 = vmul.f32 %v1379, 1.442695
    %v1381 = vpow.pop %v1380
    %v1382 = vadd.f32 %v1381, 1.0
    %v1383 = vrcp.pop %v1382
    %v1384 = vmul.f32 %v1382, %v1383
    %v1385 = vsub.f32 1.0, %v1384
    %v1386 = vmul.f32 %v1383, %v1385
    %v1387 = vadd.f32 %v1383, %v1386
    %vm1388 = vweird.f32 %v1382
    %vm1389 = vweird.f32 %v1383
    %vm1390 = vmor %vm1388, %vm1389
    %v1391 = vsel %vm1390, %v1383, %v1387
    %v1392 = vand.u32 2147483647, %v1382
    %vm1393 = vcmp.eq.f32.partialorder %v1392, 8.507059e+37
    %v1394 = vand.u32 %v1382, 2147483648
    %v1395 = vor.u32 1.1754944e-38, %v1394
    %v1396 = vsel %vm1393, %v1395, %v1391
    %v1397 = vmul.f32 1.0, %v1396
    %v1398 = vmul.f32 %v1377, %v1242
    %v1399 = vmul.f32 %v1358, %v1378
    %v1400 = vadd.f32 %v1398, %v1399
    %v1401 = vtanh.pop %v1400
    %v1402 = vmul.f32 %v1397, %v1401
    %v1403 = vld [vmem:[#allocation5] sm:$0xff]
    %v1404 = vld [vmem:[#allocation5 + $0x8] sm:$0xff]
    %v1405 = vld [vmem:[#allocation5 + $0x10] sm:$0xff]
    %v1406 = vld [vmem:[#allocation5 + $0x18] sm:$0xff]
    %v1407 = vld [vmem:[#allocation5 + $0x20] sm:$0xff]
    %v1408 = vld [vmem:[#allocation5 + $0x28] sm:$0xff]
    %v1409 = vld [vmem:[#allocation5 + $0x30] sm:$0xff]
    %v1410 = vld [vmem:[#allocation5 + $0x38] sm:$0xff]
    %v1411 = vld [vmem:[#allocation5 + $0x40] sm:$0xff]
    %v1412 = vld [vmem:[#allocation5 + $0x48] sm:$0xff]
    %v1413 = vld [vmem:[#allocation5 + $0x50] sm:$0xff]
    %v1414 = vld [vmem:[#allocation5 + $0x58] sm:$0xff]
    %v1415 = vld [vmem:[#allocation5 + $0x60] sm:$0xff]
    %v1416 = vld [vmem:[#allocation5 + $0x68] sm:$0xff]
    %v1417 = vld [vmem:[#allocation5 + $0x70] sm:$0xff]
    %v1418 = vld [vmem:[#allocation5 + $0x78] sm:$0xff]
    %v1419 = vld [vmem:[%s5] sm:$0x1]
    %v1421 = vperm.slane %v1419, 0
    %1423 = vmatpush.msra.mxu0 %v1418
    %1424 = vmatpush.msra.mxu0 %v1417
    %1425 = vmatpush.msra.mxu0 %v1416
    %1426 = vmatpush.msra.mxu0 %v1415
    %1427 = vmatpush.msra.mxu0 %v1414
    %1428 = vmatpush.msra.mxu0 %v1413
    %1429 = vmatpush.msra.mxu0 %v1412
    %1430 = vmatpush.msra.mxu0 %v1411
    %1431 = vmatpush.msra.mxu0 %v1410
    %1432 = vmatpush.msra.mxu0 %v1409
    %1433 = vmatpush.msra.mxu0 %v1408
    %1434 = vmatpush.msra.mxu0 %v1407
    %1435 = vmatpush.msra.mxu0 %v1406
    %1436 = vmatpush.msra.mxu0 %v1405
    %1437 = vmatpush.msra.mxu0 %v1404
    %1438 = vmatpush.msra.mxu0 %v1403
    %1439 = vmatmul.f32.gmra.mxu0 %v1402
    %v1440 = vpop.f32.mrf.mxu0
    %v1441 = vadd.f32 %v1421, %v1440
    %1442 = vdwg.mxu0
    %1443 = vst [vmem:[#allocation7] sm:$0xff] %v1441
    // Predicated region
    $region34: #{tpu_custom_call.1} parent=1 // pred_check
      _
    $region35: #{tpu_custom_call.1} parent=1 // pred_check_branch
      %1445 = sbr.rel (0) target = $region37
    $region36: #{tpu_custom_call.1} parent=1 // pred_region
      %1447 = vsyncadd [#allocation4], 0
      %s1449 = sshll.u32 [#allocation7], 4
      %s1450 = int_to_ptr.vmem [resolvable:$true] %s1449
      %s1451 = sshll.u32 %s6, 4
      %s1452 = int_to_ptr.hbm [resolvable:$true] %s1451
      %1454 = dma.vmem_to_hbm [thread:$0]  %s1450, 128, %s1452, [#allocation4]
    $region37: #{tpu_custom_call.1} parent=1 // pred_fallthru
      _
    // Predicated region
    $region38: #{tpu_custom_call.1} parent=1 // pred_check
      _
    $region39: #{tpu_custom_call.1} parent=1 // pred_check_branch
      %1456 = sbr.rel (0) target = $region41
    $region40: #{tpu_custom_call.1} parent=1 // pred_region
      %1458 = dma.done [#allocation4], 128
    $region41: #{tpu_custom_call.1} parent=1 // pred_fallthru
      _
    %1459 = vsyncpa [#allocation3], 1
    %1460 = vsyncpa [#allocation6], 1
    %1461 = vsyncpa [#allocation4], 1

</llo_original>
